<compile_context>
chip_gen: v5e
topology: v5e:2x2
jax: 0.10.0
libtpu: 0.0.40
codegen_flags: <defaults>
</compile_context>

<pallas_src>
import functools
import math

import jax
import jax.numpy as jnp
from jax.experimental import pallas as pl
from jax.experimental.pallas import tpu as pltpu

_FEAT_IN = 1000    # EfficientNet-B0 classifier logits
_FEAT_PAD = 1024   # padded to a 128-multiple for lane-dense loads / dense K
_OUT_PAD = 128     # action dim padded to a full lane width for dense stores

# Lane offsets of the concatenated bias vector [b1 | b2 | b3 | b4_pad];
# all 128-aligned so in-kernel static slices are clean.
_B1_OFF, _B2_OFF, _B3_OFF, _B4_OFF, _B_END = 0, 512, 768, 896, 1024


# ----------------------------------------------------------------------------
# Pallas kernel: fused MLP head
#   relu(x_bf16) -> [bf16 matmul (f32 acc) + bias + ReLU -> bf16] x3
#   -> bf16 matmul (f32 acc) + bias -> sigmoid -> f32 store
# Weights / biases use constant index maps so they are DMA'd once and stay
# VMEM resident across all batch-tile grid steps.
# ----------------------------------------------------------------------------
def actor_head_kernel(x_ref, w1_ref, w2_ref, w3_ref, w4_ref, b_ref, o_ref):
    # Concatenated f32 biases; static, 128-aligned slices.
    b1 = b_ref[:, _B1_OFF:_B2_OFF]
    b2 = b_ref[:, _B2_OFF:_B3_OFF]
    b3 = b_ref[:, _B3_OFF:_B4_OFF]
    b4 = b_ref[:, _B4_OFF:_B_END]

    # nn.ReLU() on backbone logits; x is already bf16 (ReLU commutes with the
    # cast, and zero-padded lanes stay zero).
    h = jnp.maximum(x_ref[...], 0.0)

    # Linear(1024(=1000 zero-padded) -> 512) + ReLU; f32 accumulate, bf16 act.
    h = jnp.dot(h, w1_ref[...], preferred_element_type=jnp.float32) + b1
    h = jnp.maximum(h, 0.0).astype(jnp.bfloat16)

    # Linear(512 -> 256) + ReLU
    h = jnp.dot(h, w2_ref[...], preferred_element_type=jnp.float32) + b2
    h = jnp.maximum(h, 0.0).astype(jnp.bfloat16)

    # Linear(256 -> 128) + ReLU
    h = jnp.dot(h, w3_ref[...], preferred_element_type=jnp.float32) + b3
    h = jnp.maximum(h, 0.0).astype(jnp.bfloat16)

    # Linear(128 -> 128(=A zero-padded)) + Sigmoid (padded lanes are sliced
    # off in the wrapper).
    h = jnp.dot(h, w4_ref[...], preferred_element_type=jnp.float32) + b4
    o_ref[...] = jax.nn.sigmoid(h).astype(o_ref.dtype)


# ----------------------------------------------------------------------------
# One-time parameter preparation: cast weights to bf16, zero-pad w1 rows
# (1000 -> 1024) and w4 / b4 columns (A -> 128), concatenate all biases into
# one (1, 1024) f32 vector.  Zero padding is numerically exact.  Call once
# and reuse across actor evaluations.
# ----------------------------------------------------------------------------
def prepare_kernel_params(params):
    A = params["w4"].shape[1]
    w1 = jnp.pad(params["w1"], ((0, _FEAT_PAD - _FEAT_IN), (0, 0)))
    w4 = jnp.pad(params["w4"], ((0, 0), (0, _OUT_PAD - A)))
    b4 = jnp.pad(params["b4"], ((0, 0), (0, _OUT_PAD - A)))
    bias = jnp.concatenate(
        [params["b1"], params["b2"], params["b3"], b4], axis=1
    ).astype(jnp.float32)                       # (1, 1024) = [512|256|128|128]
    kp = {
        "w1": w1.astype(jnp.bfloat16),
        "w2": params["w2"].astype(jnp.bfloat16),
        "w3": params["w3"].astype(jnp.bfloat16),
        "w4": w4.astype(jnp.bfloat16),
        "bias": bias,
    }
    return kp, A


@functools.partial(jax.jit, static_argnames=("available_actions_count",))
def actor_forward(x_feats, kparams, available_actions_count):
    """x_feats: (B, 1000) f32 backbone logits. Returns (B, A) sigmoid probs."""
    B, F = x_feats.shape
    A = available_actions_count

    # Batch tile: tb = B for small batches (single grid step, no batch pad),
    # 256-512 rows for larger batches to amortize per-step pipeline overhead
    # and MXU fill/drain on the 256-wide v6e/v7x MXU.  Footprint stays tiny
    # (~1.4 MiB weights + <=3 MiB activations) on every generation.
    if B <= 256:
        tb = B
    elif B < 1024:
        tb = 256
    else:
        tb = 512
    n_tiles = pl.cdiv(B, tb)
    b_pad = n_tiles * tb

    # Single fused pad (batch + feature lanes) and bf16 cast -> one pass over
    # x in the wrapper, halved DMA into the kernel.  Padded lanes are zero,
    # matching w1's zero rows (exact).
    x = jnp.pad(x_feats, ((0, b_pad - B), (0, _FEAT_PAD - F))).astype(jnp.bfloat16)

    w1, w2, w3, w4, bias = (kparams["w1"], kparams["w2"], kparams["w3"],
                            kparams["w4"], kparams["bias"])

    def const_spec(arr):
        # Same block every grid step -> stays VMEM resident across tiles.
        return pl.BlockSpec(arr.shape, lambda i: (0, 0))

    # v7x has 2 TensorCores/chip: core-shard the batch axis when there are
    # multiple tiles (per review, a no-op on single-core v5e/v6e); keep plain
    # "parallel" for the single-tile tiny-batch path.
    batch_sem = pltpu.CORE_PARALLEL if n_tiles >= 2 else pltpu.PARALLEL

    out = pl.pallas_call(
        actor_head_kernel,
        out_shape=jax.ShapeDtypeStruct((b_pad, _OUT_PAD), jnp.float32),
        grid=(n_tiles,),
        in_specs=[pl.BlockSpec((tb, _FEAT_PAD), lambda i: (i, 0)),
                  const_spec(w1), const_spec(w2),
                  const_spec(w3), const_spec(w4),
                  const_spec(bias)],
        out_specs=pl.BlockSpec((tb, _OUT_PAD), lambda i: (i, 0)),
        compiler_params=pltpu.CompilerParams(
            dimension_semantics=(batch_sem,),
        ),
    )(x, w1, w2, w3, w4, bias)

    return out[:B, :A]


# ----------------------------------------------------------------------------
# Deterministic parameter init (mimics torch.nn.Linear default:
# U(-1/sqrt(fan_in), 1/sqrt(fan_in)) for both weight and bias).
# Weights stored as (in_features, out_features) so y = x @ W + b.
# ----------------------------------------------------------------------------
def init_params(key, available_actions_count):
    dims = [(1000, 512), (512, 256), (256, 128), (128, available_actions_count)]
    params = {}
    for idx, (fan_in, fan_out) in enumerate(dims, start=1):
        key, kw, kb = jax.random.split(key, 3)
        bound = 1.0 / math.sqrt(fan_in)
        params[f"w{idx}"] = jax.random.uniform(
            kw, (fan_in, fan_out), jnp.float32, minval=-bound, maxval=bound)
        params[f"b{idx}"] = jax.random.uniform(
            kb, (1, fan_out), jnp.float32, minval=-bound, maxval=bound)
    return params


# Pure-JAX references.
def actor_forward_ref_f32(x, p):
    h = jnp.maximum(x, 0.0)
    h = jnp.maximum(h @ p["w1"] + p["b1"], 0.0)
    h = jnp.maximum(h @ p["w2"] + p["b2"], 0.0)
    h = jnp.maximum(h @ p["w3"] + p["b3"], 0.0)
    return jax.nn.sigmoid(h @ p["w4"] + p["b4"])


def actor_forward_ref_bf16(x, p):
    # Same numeric path as the kernel: bf16 inputs/weights/activations,
    # f32 accumulation and bias-add/ReLU.
    def dot(h, w):
        return jax.lax.dot(h, w.astype(jnp.bfloat16),
                           preferred_element_type=jnp.float32)
    h = jnp.maximum(x.astype(jnp.bfloat16), 0.0)
    h = jnp.maximum(dot(h, p["w1"]) + p["b1"], 0.0).astype(jnp.bfloat16)
    h = jnp.maximum(dot(h, p["w2"]) + p["b2"], 0.0).astype(jnp.bfloat16)
    h = jnp.maximum(dot(h, p["w3"]) + p["b3"], 0.0).astype(jnp.bfloat16)
    return jax.nn.sigmoid(dot(h, p["w4"]) + p["b4"])


if __name__ == "__main__":
    AVAILABLE_ACTIONS = 6
    BATCH = 2

    key = jax.random.PRNGKey(0)
    key, kx, kp = jax.random.split(key, 3)

    # Backbone (EfficientNet-B0 classifier) output features: (B, 1000)
    x_feats = jax.random.normal(kx, (BATCH, 1000), dtype=jnp.float32)
    params = init_params(kp, AVAILABLE_ACTIONS)

    # One-time cast/pad of weights; reuse across calls in a real RL loop.
    kparams, A = prepare_kernel_params(params)

    out = actor_forward(x_feats, kparams, A)
    out = jax.block_until_ready(out)
    assert out.shape == (BATCH, AVAILABLE_ACTIONS)

    # Tight check against a reference that follows the same bf16 compute path.
    ref_bf16 = actor_forward_ref_bf16(x_feats, params)
    assert jnp.allclose(out, ref_bf16, rtol=2e-3, atol=2e-3), \
        "mismatch vs bf16-path JAX reference"

    # Looser semantic check against the full-f32 reference.
    ref_f32 = actor_forward_ref_f32(x_feats, params)
    assert jnp.allclose(out, ref_f32, rtol=3e-2, atol=3e-2), \
        "mismatch vs f32 JAX reference"

    print("KERNEL_OK")
</pallas_src>

<mosaic_0001>
module attributes {stable_mosaic.version = 11 : i64} {
  func.func @actor_head_kernel(%arg0: i32, %arg1: memref<2x1024xbf16, #tpu.memory_space<vmem>>, %arg2: memref<1024x512xbf16, #tpu.memory_space<vmem>>, %arg3: memref<512x256xbf16, #tpu.memory_space<vmem>>, %arg4: memref<256x128xbf16, #tpu.memory_space<vmem>>, %arg5: memref<128x128xbf16, #tpu.memory_space<vmem>>, %arg6: memref<1x1024xf32, #tpu.memory_space<vmem>>, %arg7: memref<2x128xf32, #tpu.memory_space<vmem>>) attributes {dimension_semantics = [#tpu.dimension_semantics<parallel>], iteration_bounds = array<i64: 1>, scalar_prefetch = 0 : i64, scratch_operands = 0 : i64, tpu.core_type = #tpu.core_type<tc>, window_params = [{transform_indices = @transform_0, window_bounds = array<i64: 2, 1024>}, {pipeline_mode = #tpu.pipeline_mode<synchronous>, transform_indices = @transform_1, window_bounds = array<i64: 1024, 512>}, {pipeline_mode = #tpu.pipeline_mode<synchronous>, transform_indices = @transform_2, window_bounds = array<i64: 512, 256>}, {pipeline_mode = #tpu.pipeline_mode<synchronous>, transform_indices = @transform_3, window_bounds = array<i64: 256, 128>}, {pipeline_mode = #tpu.pipeline_mode<synchronous>, transform_indices = @transform_4, window_bounds = array<i64: 128, 128>}, {pipeline_mode = #tpu.pipeline_mode<synchronous>, transform_indices = @transform_5, window_bounds = array<i64: 1, 1024>}, {transform_indices = @transform_6, window_bounds = array<i64: 2, 128>}]} {
    %c0 = arith.constant 0 : index
    %c0_0 = arith.constant 0 : index
    %0 = vector.load %arg6[%c0, %c0_0] : memref<1x1024xf32, #tpu.memory_space<vmem>>, vector<1x512xf32>
    %c0_1 = arith.constant 0 : index
    %c512 = arith.constant 512 : index
    %1 = vector.load %arg6[%c0_1, %c512] : memref<1x1024xf32, #tpu.memory_space<vmem>>, vector<1x256xf32>
    %c0_2 = arith.constant 0 : index
    %c768 = arith.constant 768 : index
    %2 = vector.load %arg6[%c0_2, %c768] : memref<1x1024xf32, #tpu.memory_space<vmem>>, vector<1x128xf32>
    %c0_3 = arith.constant 0 : index
    %c896 = arith.constant 896 : index
    %3 = vector.load %arg6[%c0_3, %c896] : memref<1x1024xf32, #tpu.memory_space<vmem>>, vector<1x128xf32>
    %c0_4 = arith.constant 0 : index
    %c0_5 = arith.constant 0 : index
    %4 = vector.load %arg1[%c0_4, %c0_5] : memref<2x1024xbf16, #tpu.memory_space<vmem>>, vector<2x1024xbf16>
    %cst = arith.constant 0.000000e+00 : bf16
    %5 = vector.broadcast %cst : bf16 to vector<2x1024xbf16>
    %6 = arith.maximumf %4, %5 : vector<2x1024xbf16>
    %c0_6 = arith.constant 0 : index
    %c0_7 = arith.constant 0 : index
    %7 = vector.load %arg2[%c0_6, %c0_7] : memref<1024x512xbf16, #tpu.memory_space<vmem>>, vector<1024x512xbf16>
    %cst_8 = arith.constant dense<0.000000e+00> : vector<2x512xf32>
    %8 = tpu.matmul %6, %7, %cst_8 {dimension_numbers = #tpu.dot_dimension_numbers<[1], [0], [0], [1], [0, 0, 1, 1], [], []>} : vector<2x1024xbf16>, vector<1024x512xbf16>, vector<2x512xf32> -> vector<2x512xf32>
    %9 = vector.broadcast %0 : vector<1x512xf32> to vector<2x512xf32>
    %10 = arith.addf %8, %9 : vector<2x512xf32>
    %cst_9 = arith.constant 0.000000e+00 : f32
    %11 = vector.broadcast %cst_9 : f32 to vector<2x512xf32>
    %12 = arith.maximumf %10, %11 : vector<2x512xf32>
    %13 = arith.truncf %12 : vector<2x512xf32> to vector<2x512xbf16>
    %c0_10 = arith.constant 0 : index
    %c0_11 = arith.constant 0 : index
    %14 = vector.load %arg3[%c0_10, %c0_11] : memref<512x256xbf16, #tpu.memory_space<vmem>>, vector<512x256xbf16>
    %cst_12 = arith.constant dense<0.000000e+00> : vector<2x256xf32>
    %15 = tpu.matmul %13, %14, %cst_12 {dimension_numbers = #tpu.dot_dimension_numbers<[1], [0], [0], [1], [0, 0, 1, 1], [], []>} : vector<2x512xbf16>, vector<512x256xbf16>, vector<2x256xf32> -> vector<2x256xf32>
    %16 = vector.broadcast %1 : vector<1x256xf32> to vector<2x256xf32>
    %17 = arith.addf %15, %16 : vector<2x256xf32>
    %cst_13 = arith.constant 0.000000e+00 : f32
    %18 = vector.broadcast %cst_13 : f32 to vector<2x256xf32>
    %19 = arith.maximumf %17, %18 : vector<2x256xf32>
    %20 = arith.truncf %19 : vector<2x256xf32> to vector<2x256xbf16>
    %c0_14 = arith.constant 0 : index
    %c0_15 = arith.constant 0 : index
    %21 = vector.load %arg4[%c0_14, %c0_15] : memref<256x128xbf16, #tpu.memory_space<vmem>>, vector<256x128xbf16>
    %cst_16 = arith.constant dense<0.000000e+00> : vector<2x128xf32>
    %22 = tpu.matmul %20, %21, %cst_16 {dimension_numbers = #tpu.dot_dimension_numbers<[1], [0], [0], [1], [0, 0, 1, 1], [], []>} : vector<2x256xbf16>, vector<256x128xbf16>, vector<2x128xf32> -> vector<2x128xf32>
    %23 = vector.broadcast %2 : vector<1x128xf32> to vector<2x128xf32>
    %24 = arith.addf %22, %23 : vector<2x128xf32>
    %cst_17 = arith.constant 0.000000e+00 : f32
    %25 = vector.broadcast %cst_17 : f32 to vector<2x128xf32>
    %26 = arith.maximumf %24, %25 : vector<2x128xf32>
    %27 = arith.truncf %26 : vector<2x128xf32> to vector<2x128xbf16>
    %c0_18 = arith.constant 0 : index
    %c0_19 = arith.constant 0 : index
    %28 = vector.load %arg5[%c0_18, %c0_19] : memref<128x128xbf16, #tpu.memory_space<vmem>>, vector<128x128xbf16>
    %cst_20 = arith.constant dense<0.000000e+00> : vector<2x128xf32>
    %29 = tpu.matmul %27, %28, %cst_20 {dimension_numbers = #tpu.dot_dimension_numbers<[1], [0], [0], [1], [0, 0, 1, 1], [], []>} : vector<2x128xbf16>, vector<128x128xbf16>, vector<2x128xf32> -> vector<2x128xf32>
    %30 = vector.broadcast %3 : vector<1x128xf32> to vector<2x128xf32>
    %31 = arith.addf %29, %30 : vector<2x128xf32>
    %32 = arith.negf %31 : vector<2x128xf32>
    %33 = math.exp %32 : vector<2x128xf32>
    %cst_21 = arith.constant 1.000000e+00 : f32
    %34 = vector.broadcast %cst_21 : f32 to vector<2x128xf32>
    %35 = arith.addf %34, %33 : vector<2x128xf32>
    %36 = arith.divf %34, %35 : vector<2x128xf32>
    %c0_22 = arith.constant 0 : index
    %c0_23 = arith.constant 0 : index
    %37 = vector.load %arg7[%c0_22, %c0_23] : memref<2x128xf32, #tpu.memory_space<vmem>>, vector<2x128xf32>
    tpu.vector_store %arg7[%c0_22, %c0_23], %36 {strides = array<i32>} : memref<2x128xf32, #tpu.memory_space<vmem>>, vector<2x128xf32>,
    return
  }
  func.func @transform_0(%arg0: i32) -> (i32, i32) {
    %c0_i32 = arith.constant 0 : i32
    %c0_i32_0 = arith.constant 0 : i32
    return %arg0, %c0_i32 : i32, i32
  }
  func.func @transform_1(%arg0: i32) -> (i32, i32) {
    %c0_i32 = arith.constant 0 : i32
    %c0_i32_0 = arith.constant 0 : i32
    %c0_i32_1 = arith.constant 0 : i32
    return %c0_i32, %c0_i32_0 : i32, i32
  }
  func.func @transform_2(%arg0: i32) -> (i32, i32) {
    %c0_i32 = arith.constant 0 : i32
    %c0_i32_0 = arith.constant 0 : i32
    %c0_i32_1 = arith.constant 0 : i32
    return %c0_i32, %c0_i32_0 : i32, i32
  }
  func.func @transform_3(%arg0: i32) -> (i32, i32) {
    %c0_i32 = arith.constant 0 : i32
    %c0_i32_0 = arith.constant 0 : i32
    %c0_i32_1 = arith.constant 0 : i32
    return %c0_i32, %c0_i32_0 : i32, i32
  }
  func.func @transform_4(%arg0: i32) -> (i32, i32) {
    %c0_i32 = arith.constant 0 : i32
    %c0_i32_0 = arith.constant 0 : i32
    %c0_i32_1 = arith.constant 0 : i32
    return %c0_i32, %c0_i32_0 : i32, i32
  }
  func.func @transform_5(%arg0: i32) -> (i32, i32) {
    %c0_i32 = arith.constant 0 : i32
    %c0_i32_0 = arith.constant 0 : i32
    %c0_i32_1 = arith.constant 0 : i32
    return %c0_i32, %c0_i32_0 : i32, i32
  }
  func.func @transform_6(%arg0: i32) -> (i32, i32) {
    %c0_i32 = arith.constant 0 : i32
    %c0_i32_0 = arith.constant 0 : i32
    return %arg0, %c0_i32 : i32, i32
  }
}

</mosaic_0001>

<llo_original>
// kernel: actor_forward.1
$region0: #{actor_forward.1}
  #allocation0 [shape = 'u32[]', space=smem, size = 0x4, offset = 0x4, fixed_abs, tag = 'smem constant byte address 0x4 - core index']
  #allocation1 [shape = 'u32[72,128]{1,0:T(1,128)}', space=vmem, size = 0x9000, scoped, tag = 'internal scratch']
  %s0 = inlined_call_operand.vmem [shape: bf16[2,1024], index: 0, kind: input, shape index: {}]
  %s1 = inlined_call_operand.hbm [shape: bf16[1024,512], index: 1, kind: input, shape index: {}]
  %s2 = inlined_call_operand.hbm [shape: bf16[512,256], index: 2, kind: input, shape index: {}]
  %s3 = inlined_call_operand.hbm [shape: bf16[256,128], index: 3, kind: input, shape index: {}]
  %s4 = inlined_call_operand.hbm [shape: bf16[128,128], index: 4, kind: input, shape index: {}]
  %s5 = inlined_call_operand.vmem [shape: f32[1,1024], index: 5, kind: input, shape index: {}]
  %s6 = inlined_call_operand.hbm [shape: f32[2,128], index: 6, kind: output, shape index: {}]
  %s7 = sld [smem:[#allocation0]]
  $region50: #{actor_forward.1} parent=0
    _
  %s9 = ssub.s32 1, %s7
  %s10 = scalar_select 0, %s9, %s7
  $region1: #{actor_forward.1} parent=0
    #allocation2 [shape = 'u8[1048576]{0}', space=vmem, size = 0x100000, scoped, tag = 'input window, operand 1, single buffered']
    #allocation3 [shape = 's32[1]{0}', space=sflag, size = 0x4, scoped, tag = 'scoped memory for actor_forward.1']
    #allocation4 [shape = 's32[1]{0}', space=sflag, size = 0x4, scoped, tag = 'scoped memory for actor_forward.1']
    #allocation5 [shape = 'u8[262144]{0}', space=vmem, size = 0x40000, scoped, tag = 'input window, operand 2, single buffered']
    #allocation6 [shape = 's32[1]{0}', space=sflag, size = 0x4, scoped, tag = 'scoped memory for actor_forward.1']
    #allocation7 [shape = 'u8[65536]{0}', space=vmem, size = 0x10000, scoped, tag = 'input window, operand 3, single buffered']
    #allocation8 [shape = 'u8[32768]{0}', space=vmem, size = 0x8000, scoped, tag = 'input window, operand 4, single buffered']
    #allocation9 [shape = 's32[1]{0}', space=sflag, size = 0x4, scoped, tag = 'scoped memory for actor_forward.1']
    #allocation10 [shape = 'u8[1024]{0}', space=vmem, size = 0x400, scoped, tag = 'output window, operand 0, single buffered']
    %11 = vsyncpa [#allocation3], 0
    %12 = vsyncpa [#allocation6], 0
    %13 = vsyncpa [#allocation9], 0
    %14 = vsyncpa [#allocation4], 0
    // Predicated region
    $region2: #{actor_forward.1} parent=1 // pred_check
      _
    $region3: #{actor_forward.1} parent=1 // pred_check_branch
      %16 = sbr.rel (0) target = $region5
    $region4: #{actor_forward.1} parent=1 // pred_region
      _
    $region5: #{actor_forward.1} parent=1 // pred_fallthru
      _
    // Predicated region
    $region6: #{actor_forward.1} parent=1 // pred_check
      _
    $region7: #{actor_forward.1} parent=1 // pred_check_branch
      %18 = sbr.rel (0) target = $region9
    $region8: #{actor_forward.1} parent=1 // pred_region
      %20 = vsyncadd [#allocation3], 0
      %s21 = sshll.u32 %s1, 4
      %s22 = int_to_ptr.hbm [resolvable:$true] %s21
      %s23 = sshll.u32 [#allocation2], 4
      %s24 = int_to_ptr.vmem [resolvable:$true] %s23
      %29 = dma.hbm_to_vmem [thread:$0]  %s22, 32768, %s24, [#allocation3], 256, 256, 16
    $region9: #{actor_forward.1} parent=1 // pred_fallthru
      _
    // Predicated region
    $region10: #{actor_forward.1} parent=1 // pred_check
      _
    $region11: #{actor_forward.1} parent=1 // pred_check_branch
      %31 = sbr.rel (0) target = $region13
    $region12: #{actor_forward.1} parent=1 // pred_region
      %33 = vsyncadd [#allocation6], 0
      %s34 = sshll.u32 %s2, 4
      %s35 = int_to_ptr.hbm [resolvable:$true] %s34
      %s36 = sshll.u32 [#allocation5], 4
      %s37 = int_to_ptr.vmem [resolvable:$true] %s36
      %42 = dma.hbm_to_vmem [thread:$0]  %s35, 8192, %s37, [#allocation6], 128, 128, 8
    $region13: #{actor_forward.1} parent=1 // pred_fallthru
      _
    // Predicated region
    $region14: #{actor_forward.1} parent=1 // pred_check
      _
    $region15: #{actor_forward.1} parent=1 // pred_check_branch
      %44 = sbr.rel (0) target = $region17
    $region16: #{actor_forward.1} parent=1 // pred_region
      %46 = vsyncadd [#allocation6], 0
      %s47 = sshll.u32 %s3, 4
      %s48 = int_to_ptr.hbm [resolvable:$true] %s47
      %s49 = sshll.u32 [#allocation7], 4
      %s50 = int_to_ptr.vmem [resolvable:$true] %s49
      %55 = dma.hbm_to_vmem [thread:$0]  %s48, 2048, %s50, [#allocation6], 64, 64, 4
    $region17: #{actor_forward.1} parent=1 // pred_fallthru
      _
    // Predicated region
    $region18: #{actor_forward.1} parent=1 // pred_check
      _
    $region19: #{actor_forward.1} parent=1 // pred_check_branch
      %57 = sbr.rel (0) target = $region21
    $region20: #{actor_forward.1} parent=1 // pred_region
      %59 = vsyncadd [#allocation9], 0
      %s60 = sshll.u32 %s4, 4
      %s61 = int_to_ptr.hbm [resolvable:$true] %s60
      %s62 = sshll.u32 [#allocation8], 4
      %s63 = int_to_ptr.vmem [resolvable:$true] %s62
      %68 = dma.hbm_to_vmem [thread:$0]  %s61, 1024, %s63, [#allocation9], 64, 64, 4
    $region21: #{actor_forward.1} parent=1 // pred_fallthru
      _
    // Predicated region
    $region22: #{actor_forward.1} parent=1 // pred_check
      _
    $region23: #{actor_forward.1} parent=1 // pred_check_branch
      %70 = sbr.rel (0) target = $region25
    $region24: #{actor_forward.1} parent=1 // pred_region
      _
    $region25: #{actor_forward.1} parent=1 // pred_fallthru
      _
    // Predicated region
    $region26: #{actor_forward.1} parent=1 // pred_check
      _
    $region27: #{actor_forward.1} parent=1 // pred_check_branch
      %72 = sbr.rel (0) target = $region29
    $region28: #{actor_forward.1} parent=1 // pred_region
      %74 = dma.done [#allocation3], 32768
    $region29: #{actor_forward.1} parent=1 // pred_fallthru
      _
    // Predicated region
    $region30: #{actor_forward.1} parent=1 // pred_check
      _
    $region31: #{actor_forward.1} parent=1 // pred_check_branch
      %76 = sbr.rel (0) target = $region33
    $region32: #{actor_forward.1} parent=1 // pred_region
      %78 = dma.done [#allocation6], 8192
    $region33: #{actor_forward.1} parent=1 // pred_fallthru
      _
    // Predicated region
    $region34: #{actor_forward.1} parent=1 // pred_check
      _
    $region35: #{actor_forward.1} parent=1 // pred_check_branch
      %80 = sbr.rel (0) target = $region37
    $region36: #{actor_forward.1} parent=1 // pred_region
      %82 = dma.done [#allocation6], 2048
    $region37: #{actor_forward.1} parent=1 // pred_fallthru
      _
    // Predicated region
    $region38: #{actor_forward.1} parent=1 // pred_check
      _
    $region39: #{actor_forward.1} parent=1 // pred_check_branch
      %84 = sbr.rel (0) target = $region41
    $region40: #{actor_forward.1} parent=1 // pred_region
      %86 = dma.done [#allocation9], 1024
    $region41: #{actor_forward.1} parent=1 // pred_fallthru
      _
    %v87 = vld [vmem:[%s5] sm:$0xf]
    %v88 = vld [vmem:[%s5 + $0x4] sm:$0x3]
    %v89 = vld [vmem:[%s5 + $0x6] sm:$0x1]
    %v90 = vld [vmem:[%s5 + $0x7] sm:$0x1]
    %v91 = vld [vmem:[%s0] sm:$0xff]
    %v92 = vunpack.c.l.bf16 %v91
    %v93 = vunpack.c.h.bf16 %v91
    %v94 = vmax.f32 %v92, 0.0
    %v95 = vmax.f32 %v93, 0.0
    %98 = vst [vmem:[#allocation1] ss:$4 sm:$0xff] %v94
    %s99 = scalar_lea.vmem [#allocation1], 32
    %100 = vst [vmem:[%s99] ss:$4 sm:$0xff] %v95
    %v101 = vld.sshfl [vmem:[#allocation1] sm:$0xff pattern:$0x73625140]
    %v102 = vld.sshfl [vmem:[#allocation1 + $0x8] sm:$0xff pattern:$0x73625140]
    %v103 = vld.sshfl [vmem:[#allocation1 + $0x10] sm:$0xff pattern:$0x73625140]
    %v104 = vld.sshfl [vmem:[#allocation1 + $0x18] sm:$0xff pattern:$0x73625140]
    %v105 = vld.sshfl [vmem:[#allocation1 + $0x20] sm:$0xff pattern:$0x73625140]
    %v106 = vld.sshfl [vmem:[#allocation1 + $0x28] sm:$0xff pattern:$0x73625140]
    %v107 = vld.sshfl [vmem:[#allocation1 + $0x30] sm:$0xff pattern:$0x73625140]
    %v108 = vld.sshfl [vmem:[#allocation1 + $0x38] sm:$0xff pattern:$0x73625140]
    %v117 = vpack.c.bf16 %v101, %v101
    %v118 = vpack.c.bf16 %v102, %v102
    %v119 = vpack.c.bf16 %v103, %v103
    %v120 = vpack.c.bf16 %v104, %v104
    %v121 = vpack.c.bf16 %v105, %v105
    %v122 = vpack.c.bf16 %v106, %v106
    %v123 = vpack.c.bf16 %v107, %v107
    %v124 = vpack.c.bf16 %v108, %v108
    %v125 = vld [vmem:[#allocation2] sm:$0xff]
    %v126 = vld [vmem:[#allocation2 + $0x8] sm:$0xff]
    %v127 = vld [vmem:[#allocation2 + $0x10] sm:$0xff]
    %v128 = vld [vmem:[#allocation2 + $0x18] sm:$0xff]
    %v129 = vld [vmem:[#allocation2 + $0x20] sm:$0xff]
    %v130 = vld [vmem:[#allocation2 + $0x28] sm:$0xff]
    %v131 = vld [vmem:[#allocation2 + $0x30] sm:$0xff]
    %v132 = vld [vmem:[#allocation2 + $0x38] sm:$0xff]
    %v133 = vld [vmem:[#allocation2 + $0x40] sm:$0xff]
    %v134 = vld [vmem:[#allocation2 + $0x48] sm:$0xff]
    %v135 = vld [vmem:[#allocation2 + $0x50] sm:$0xff]
    %v136 = vld [vmem:[#allocation2 + $0x58] sm:$0xff]
    %v137 = vld [vmem:[#allocation2 + $0x60] sm:$0xff]
    %v138 = vld [vmem:[#allocation2 + $0x68] sm:$0xff]
    %v139 = vld [vmem:[#allocation2 + $0x70] sm:$0xff]
    %v140 = vld [vmem:[#allocation2 + $0x78] sm:$0xff]
    %v141 = vld [vmem:[#allocation2 + $0x80] sm:$0xff]
    %v142 = vld [vmem:[#allocation2 + $0x88] sm:$0xff]
    %v143 = vld [vmem:[#allocation2 + $0x90] sm:$0xff]
    %v144 = vld [vmem:[#allocation2 + $0x98] sm:$0xff]
    %v145 = vld [vmem:[#allocation2 + $0xa0] sm:$0xff]
    %v146 = vld [vmem:[#allocation2 + $0xa8] sm:$0xff]
    %v147 = vld [vmem:[#allocation2 + $0xb0] sm:$0xff]
    %v148 = vld [vmem:[#allocation2 + $0xb8] sm:$0xff]
    %v149 = vld [vmem:[#allocation2 + $0xc0] sm:$0xff]
    %v150 = vld [vmem:[#allocation2 + $0xc8] sm:$0xff]
    %v151 = vld [vmem:[#allocation2 + $0xd0] sm:$0xff]
    %v152 = vld [vmem:[#allocation2 + $0xd8] sm:$0xff]
    %v153 = vld [vmem:[#allocation2 + $0xe0] sm:$0xff]
    %v154 = vld [vmem:[#allocation2 + $0xe8] sm:$0xff]
    %v155 = vld [vmem:[#allocation2 + $0xf0] sm:$0xff]
    %v156 = vld [vmem:[#allocation2 + $0xf8] sm:$0xff]
    %v157 = vld [vmem:[#allocation2 + $0x100] sm:$0xff]
    %v158 = vld [vmem:[#allocation2 + $0x108] sm:$0xff]
    %v159 = vld [vmem:[#allocation2 + $0x110] sm:$0xff]
    %v160 = vld [vmem:[#allocation2 + $0x118] sm:$0xff]
    %v161 = vld [vmem:[#allocation2 + $0x120] sm:$0xff]
    %v162 = vld [vmem:[#allocation2 + $0x128] sm:$0xff]
    %v163 = vld [vmem:[#allocation2 + $0x130] sm:$0xff]
    %v164 = vld [vmem:[#allocation2 + $0x138] sm:$0xff]
    %v165 = vld [vmem:[#allocation2 + $0x140] sm:$0xff]
    %v166 = vld [vmem:[#allocation2 + $0x148] sm:$0xff]
    %v167 = vld [vmem:[#allocation2 + $0x150] sm:$0xff]
    %v168 = vld [vmem:[#allocation2 + $0x158] sm:$0xff]
    %v169 = vld [vmem:[#allocation2 + $0x160] sm:$0xff]
    %v170 = vld [vmem:[#allocation2 + $0x168] sm:$0xff]
    %v171 = vld [vmem:[#allocation2 + $0x170] sm:$0xff]
    %v172 = vld [vmem:[#allocation2 + $0x178] sm:$0xff]
    %v173 = vld [vmem:[#allocation2 + $0x180] sm:$0xff]
    %v174 = vld [vmem:[#allocation2 + $0x188] sm:$0xff]
    %v175 = vld [vmem:[#allocation2 + $0x190] sm:$0xff]
    %v176 = vld [vmem:[#allocation2 + $0x198] sm:$0xff]
    %v177 = vld [vmem:[#allocation2 + $0x1a0] sm:$0xff]
    %v178 = vld [vmem:[#allocation2 + $0x1a8] sm:$0xff]
    %v179 = vld [vmem:[#allocation2 + $0x1b0] sm:$0xff]
    %v180 = vld [vmem:[#allocation2 + $0x1b8] sm:$0xff]
    %v181 = vld [vmem:[#allocation2 + $0x1c0] sm:$0xff]
    %v182 = vld [vmem:[#allocation2 + $0x1c8] sm:$0xff]
    %v183 = vld [vmem:[#allocation2 + $0x1d0] sm:$0xff]
    %v184 = vld [vmem:[#allocation2 + $0x1d8] sm:$0xff]
    %v185 = vld [vmem:[#allocation2 + $0x1e0] sm:$0xff]
    %v186 = vld [vmem:[#allocation2 + $0x1e8] sm:$0xff]
    %v187 = vld [vmem:[#allocation2 + $0x1f0] sm:$0xff]
    %v188 = vld [vmem:[#allocation2 + $0x1f8] sm:$0xff]
    %v189 = vld [vmem:[#allocation2 + $0x200] sm:$0xff]
    %v190 = vld [vmem:[#allocation2 + $0x208] sm:$0xff]
    %v191 = vld [vmem:[#allocation2 + $0x210] sm:$0xff]
    %v192 = vld [vmem:[#allocation2 + $0x218] sm:$0xff]
    %v193 = vld [vmem:[#allocation2 + $0x220] sm:$0xff]
    %v194 = vld [vmem:[#allocation2 + $0x228] sm:$0xff]
    %v195 = vld [vmem:[#allocation2 + $0x230] sm:$0xff]
    %v196 = vld [vmem:[#allocation2 + $0x238] sm:$0xff]
    %v197 = vld [vmem:[#allocation2 + $0x240] sm:$0xff]
    %v198 = vld [vmem:[#allocation2 + $0x248] sm:$0xff]
    %v199 = vld [vmem:[#allocation2 + $0x250] sm:$0xff]
    %v200 = vld [vmem:[#allocation2 + $0x258] sm:$0xff]
    %v201 = vld [vmem:[#allocation2 + $0x260] sm:$0xff]
    %v202 = vld [vmem:[#allocation2 + $0x268] sm:$0xff]
    %v203 = vld [vmem:[#allocation2 + $0x270] sm:$0xff]
    %v204 = vld [vmem:[#allocation2 + $0x278] sm:$0xff]
    %v205 = vld [vmem:[#allocation2 + $0x280] sm:$0xff]
    %v206 = vld [vmem:[#allocation2 + $0x288] sm:$0xff]
    %v207 = vld [vmem:[#allocation2 + $0x290] sm:$0xff]
    %v208 = vld [vmem:[#allocation2 + $0x298] sm:$0xff]
    %v209 = vld [vmem:[#allocation2 + $0x2a0] sm:$0xff]
    %v210 = vld [vmem:[#allocation2 + $0x2a8] sm:$0xff]
    %v211 = vld [vmem:[#allocation2 + $0x2b0] sm:$0xff]
    %v212 = vld [vmem:[#allocation2 + $0x2b8] sm:$0xff]
    %v213 = vld [vmem:[#allocation2 + $0x2c0] sm:$0xff]
    %v214 = vld [vmem:[#allocation2 + $0x2c8] sm:$0xff]
    %v215 = vld [vmem:[#allocation2 + $0x2d0] sm:$0xff]
    %v216 = vld [vmem:[#allocation2 + $0x2d8] sm:$0xff]
    %v217 = vld [vmem:[#allocation2 + $0x2e0] sm:$0xff]
    %v218 = vld [vmem:[#allocation2 + $0x2e8] sm:$0xff]
    %v219 = vld [vmem:[#allocation2 + $0x2f0] sm:$0xff]
    %v220 = vld [vmem:[#allocation2 + $0x2f8] sm:$0xff]
    %v221 = vld [vmem:[#allocation2 + $0x300] sm:$0xff]
    %v222 = vld [vmem:[#allocation2 + $0x308] sm:$0xff]
    %v223 = vld [vmem:[#allocation2 + $0x310] sm:$0xff]
    %v224 = vld [vmem:[#allocation2 + $0x318] sm:$0xff]
    %v225 = vld [vmem:[#allocation2 + $0x320] sm:$0xff]
    %v226 = vld [vmem:[#allocation2 + $0x328] sm:$0xff]
    %v227 = vld [vmem:[#allocation2 + $0x330] sm:$0xff]
    %v228 = vld [vmem:[#allocation2 + $0x338] sm:$0xff]
    %v229 = vld [vmem:[#allocation2 + $0x340] sm:$0xff]
    %v230 = vld [vmem:[#allocation2 + $0x348] sm:$0xff]
    %v231 = vld [vmem:[#allocation2 + $0x350] sm:$0xff]
    %v232 = vld [vmem:[#allocation2 + $0x358] sm:$0xff]
    %v233 = vld [vmem:[#allocation2 + $0x360] sm:$0xff]
    %v234 = vld [vmem:[#allocation2 + $0x368] sm:$0xff]
    %v235 = vld [vmem:[#allocation2 + $0x370] sm:$0xff]
    %v236 = vld [vmem:[#allocation2 + $0x378] sm:$0xff]
    %v237 = vld [vmem:[#allocation2 + $0x380] sm:$0xff]
    %v238 = vld [vmem:[#allocation2 + $0x388] sm:$0xff]
    %v239 = vld [vmem:[#allocation2 + $0x390] sm:$0xff]
    %v240 = vld [vmem:[#allocation2 + $0x398] sm:$0xff]
    %v241 = vld [vmem:[#allocation2 + $0x3a0] sm:$0xff]
    %v242 = vld [vmem:[#allocation2 + $0x3a8] sm:$0xff]
    %v243 = vld [vmem:[#allocation2 + $0x3b0] sm:$0xff]
    %v244 = vld [vmem:[#allocation2 + $0x3b8] sm:$0xff]
    %v245 = vld [vmem:[#allocation2 + $0x3c0] sm:$0xff]
    %v246 = vld [vmem:[#allocation2 + $0x3c8] sm:$0xff]
    %v247 = vld [vmem:[#allocation2 + $0x3d0] sm:$0xff]
    %v248 = vld [vmem:[#allocation2 + $0x3d8] sm:$0xff]
    %v249 = vld [vmem:[#allocation2 + $0x3e0] sm:$0xff]
    %v250 = vld [vmem:[#allocation2 + $0x3e8] sm:$0xff]
    %v251 = vld [vmem:[#allocation2 + $0x3f0] sm:$0xff]
    %v252 = vld [vmem:[#allocation2 + $0x3f8] sm:$0xff]
    %v253 = vld [vmem:[#allocation2 + $0x400] sm:$0xff]
    %v254 = vld [vmem:[#allocation2 + $0x408] sm:$0xff]
    %v255 = vld [vmem:[#allocation2 + $0x410] sm:$0xff]
    %v256 = vld [vmem:[#allocation2 + $0x418] sm:$0xff]
    %v257 = vld [vmem:[#allocation2 + $0x420] sm:$0xff]
    %v258 = vld [vmem:[#allocation2 + $0x428] sm:$0xff]
    %v259 = vld [vmem:[#allocation2 + $0x430] sm:$0xff]
    %v260 = vld [vmem:[#allocation2 + $0x438] sm:$0xff]
    %v261 = vld [vmem:[#allocation2 + $0x440] sm:$0xff]
    %v262 = vld [vmem:[#allocation2 + $0x448] sm:$0xff]
    %v263 = vld [vmem:[#allocation2 + $0x450] sm:$0xff]
    %v264 = vld [vmem:[#allocation2 + $0x458] sm:$0xff]
    %v265 = vld [vmem:[#allocation2 + $0x460] sm:$0xff]
    %v266 = vld [vmem:[#allocation2 + $0x468] sm:$0xff]
    %v267 = vld [vmem:[#allocation2 + $0x470] sm:$0xff]
    %v268 = vld [vmem:[#allocation2 + $0x478] sm:$0xff]
    %v269 = vld [vmem:[#allocation2 + $0x480] sm:$0xff]
    %v270 = vld [vmem:[#allocation2 + $0x488] sm:$0xff]
    %v271 = vld [vmem:[#allocation2 + $0x490] sm:$0xff]
    %v272 = vld [vmem:[#allocation2 + $0x498] sm:$0xff]
    %v273 = vld [vmem:[#allocation2 + $0x4a0] sm:$0xff]
    %v274 = vld [vmem:[#allocation2 + $0x4a8] sm:$0xff]
    %v275 = vld [vmem:[#allocation2 + $0x4b0] sm:$0xff]
    %v276 = vld [vmem:[#allocation2 + $0x4b8] sm:$0xff]
    %v277 = vld [vmem:[#allocation2 + $0x4c0] sm:$0xff]
    %v278 = vld [vmem:[#allocation2 + $0x4c8] sm:$0xff]
    %v279 = vld [vmem:[#allocation2 + $0x4d0] sm:$0xff]
    %v280 = vld [vmem:[#allocation2 + $0x4d8] sm:$0xff]
    %v281 = vld [vmem:[#allocation2 + $0x4e0] sm:$0xff]
    %v282 = vld [vmem:[#allocation2 + $0x4e8] sm:$0xff]
    %v283 = vld [vmem:[#allocation2 + $0x4f0] sm:$0xff]
    %v284 = vld [vmem:[#allocation2 + $0x4f8] sm:$0xff]
    %v285 = vld [vmem:[#allocation2 + $0x500] sm:$0xff]
    %v286 = vld [vmem:[#allocation2 + $0x508] sm:$0xff]
    %v287 = vld [vmem:[#allocation2 + $0x510] sm:$0xff]
    %v288 = vld [vmem:[#allocation2 + $0x518] sm:$0xff]
    %v289 = vld [vmem:[#allocation2 + $0x520] sm:$0xff]
    %v290 = vld [vmem:[#allocation2 + $0x528] sm:$0xff]
    %v291 = vld [vmem:[#allocation2 + $0x530] sm:$0xff]
    %v292 = vld [vmem:[#allocation2 + $0x538] sm:$0xff]
    %v293 = vld [vmem:[#allocation2 + $0x540] sm:$0xff]
    %v294 = vld [vmem:[#allocation2 + $0x548] sm:$0xff]
    %v295 = vld [vmem:[#allocation2 + $0x550] sm:$0xff]
    %v296 = vld [vmem:[#allocation2 + $0x558] sm:$0xff]
    %v297 = vld [vmem:[#allocation2 + $0x560] sm:$0xff]
    %v298 = vld [vmem:[#allocation2 + $0x568] sm:$0xff]
    %v299 = vld [vmem:[#allocation2 + $0x570] sm:$0xff]
    %v300 = vld [vmem:[#allocation2 + $0x578] sm:$0xff]
    %v301 = vld [vmem:[#allocation2 + $0x580] sm:$0xff]
    %v302 = vld [vmem:[#allocation2 + $0x588] sm:$0xff]
    %v303 = vld [vmem:[#allocation2 + $0x590] sm:$0xff]
    %v304 = vld [vmem:[#allocation2 + $0x598] sm:$0xff]
    %v305 = vld [vmem:[#allocation2 + $0x5a0] sm:$0xff]
    %v306 = vld [vmem:[#allocation2 + $0x5a8] sm:$0xff]
    %v307 = vld [vmem:[#allocation2 + $0x5b0] sm:$0xff]
    %v308 = vld [vmem:[#allocation2 + $0x5b8] sm:$0xff]
    %v309 = vld [vmem:[#allocation2 + $0x5c0] sm:$0xff]
    %v310 = vld [vmem:[#allocation2 + $0x5c8] sm:$0xff]
    %v311 = vld [vmem:[#allocation2 + $0x5d0] sm:$0xff]
    %v312 = vld [vmem:[#allocation2 + $0x5d8] sm:$0xff]
    %v313 = vld [vmem:[#allocation2 + $0x5e0] sm:$0xff]
    %v314 = vld [vmem:[#allocation2 + $0x5e8] sm:$0xff]
    %v315 = vld [vmem:[#allocation2 + $0x5f0] sm:$0xff]
    %v316 = vld [vmem:[#allocation2 + $0x5f8] sm:$0xff]
    %v317 = vld [vmem:[#allocation2 + $0x600] sm:$0xff]
    %v318 = vld [vmem:[#allocation2 + $0x608] sm:$0xff]
    %v319 = vld [vmem:[#allocation2 + $0x610] sm:$0xff]
    %v320 = vld [vmem:[#allocation2 + $0x618] sm:$0xff]
    %v321 = vld [vmem:[#allocation2 + $0x620] sm:$0xff]
    %v322 = vld [vmem:[#allocation2 + $0x628] sm:$0xff]
    %v323 = vld [vmem:[#allocation2 + $0x630] sm:$0xff]
    %v324 = vld [vmem:[#allocation2 + $0x638] sm:$0xff]
    %v325 = vld [vmem:[#allocation2 + $0x640] sm:$0xff]
    %v326 = vld [vmem:[#allocation2 + $0x648] sm:$0xff]
    %v327 = vld [vmem:[#allocation2 + $0x650] sm:$0xff]
    %v328 = vld [vmem:[#allocation2 + $0x658] sm:$0xff]
    %v329 = vld [vmem:[#allocation2 + $0x660] sm:$0xff]
    %v330 = vld [vmem:[#allocation2 + $0x668] sm:$0xff]
    %v331 = vld [vmem:[#allocation2 + $0x670] sm:$0xff]
    %v332 = vld [vmem:[#allocation2 + $0x678] sm:$0xff]
    %v333 = vld [vmem:[#allocation2 + $0x680] sm:$0xff]
    %v334 = vld [vmem:[#allocation2 + $0x688] sm:$0xff]
    %v335 = vld [vmem:[#allocation2 + $0x690] sm:$0xff]
    %v336 = vld [vmem:[#allocation2 + $0x698] sm:$0xff]
    %v337 = vld [vmem:[#allocation2 + $0x6a0] sm:$0xff]
    %v338 = vld [vmem:[#allocation2 + $0x6a8] sm:$0xff]
    %v339 = vld [vmem:[#allocation2 + $0x6b0] sm:$0xff]
    %v340 = vld [vmem:[#allocation2 + $0x6b8] sm:$0xff]
    %v341 = vld [vmem:[#allocation2 + $0x6c0] sm:$0xff]
    %v342 = vld [vmem:[#allocation2 + $0x6c8] sm:$0xff]
    %v343 = vld [vmem:[#allocation2 + $0x6d0] sm:$0xff]
    %v344 = vld [vmem:[#allocation2 + $0x6d8] sm:$0xff]
    %v345 = vld [vmem:[#allocation2 + $0x6e0] sm:$0xff]
    %v346 = vld [vmem:[#allocation2 + $0x6e8] sm:$0xff]
    %v347 = vld [vmem:[#allocation2 + $0x6f0] sm:$0xff]
    %v348 = vld [vmem:[#allocation2 + $0x6f8] sm:$0xff]
    %v349 = vld [vmem:[#allocation2 + $0x700] sm:$0xff]
    %v350 = vld [vmem:[#allocation2 + $0x708] sm:$0xff]
    %v351 = vld [vmem:[#allocation2 + $0x710] sm:$0xff]
    %v352 = vld [vmem:[#allocation2 + $0x718] sm:$0xff]
    %v353 = vld [vmem:[#allocation2 + $0x720] sm:$0xff]
    %v354 = vld [vmem:[#allocation2 + $0x728] sm:$0xff]
    %v355 = vld [vmem:[#allocation2 + $0x730] sm:$0xff]
    %v356 = vld [vmem:[#allocation2 + $0x738] sm:$0xff]
    %v357 = vld [vmem:[#allocation2 + $0x740] sm:$0xff]
    %v358 = vld [vmem:[#allocation2 + $0x748] sm:$0xff]
    %v359 = vld [vmem:[#allocation2 + $0x750] sm:$0xff]
    %v360 = vld [vmem:[#allocation2 + $0x758] sm:$0xff]
    %v361 = vld [vmem:[#allocation2 + $0x760] sm:$0xff]
    %v362 = vld [vmem:[#allocation2 + $0x768] sm:$0xff]
    %v363 = vld [vmem:[#allocation2 + $0x770] sm:$0xff]
    %v364 = vld [vmem:[#allocation2 + $0x778] sm:$0xff]
    %v365 = vld [vmem:[#allocation2 + $0x780] sm:$0xff]
    %v366 = vld [vmem:[#allocation2 + $0x788] sm:$0xff]
    %v367 = vld [vmem:[#allocation2 + $0x790] sm:$0xff]
    %v368 = vld [vmem:[#allocation2 + $0x798] sm:$0xff]
    %v369 = vld [vmem:[#allocation2 + $0x7a0] sm:$0xff]
    %v370 = vld [vmem:[#allocation2 + $0x7a8] sm:$0xff]
    %v371 = vld [vmem:[#allocation2 + $0x7b0] sm:$0xff]
    %v372 = vld [vmem:[#allocation2 + $0x7b8] sm:$0xff]
    %v373 = vld [vmem:[#allocation2 + $0x7c0] sm:$0xff]
    %v374 = vld [vmem:[#allocation2 + $0x7c8] sm:$0xff]
    %v375 = vld [vmem:[#allocation2 + $0x7d0] sm:$0xff]
    %v376 = vld [vmem:[#allocation2 + $0x7d8] sm:$0xff]
    %v377 = vld [vmem:[#allocation2 + $0x7e0] sm:$0xff]
    %v378 = vld [vmem:[#allocation2 + $0x7e8] sm:$0xff]
    %v379 = vld [vmem:[#allocation2 + $0x7f0] sm:$0xff]
    %v380 = vld [vmem:[#allocation2 + $0x7f8] sm:$0xff]
    %v382 = vperm.slane %v87, 0
    %v383 = vperm.slane %v87, 1
    %v384 = vperm.slane %v87, 2
    %v385 = vperm.slane %v87, 3
    %v646 = vunpack.c.l.b16 %v125
    %v647 = vunpack.c.h.b16 %v125
    %v648 = vunpack.c.l.b16 %v126
    %v649 = vunpack.c.h.b16 %v126
    %v650 = vunpack.c.l.b16 %v127
    %v651 = vunpack.c.h.b16 %v127
    %v652 = vunpack.c.l.b16 %v128
    %v653 = vunpack.c.h.b16 %v128
    %v654 = vunpack.c.l.b16 %v129
    %v655 = vunpack.c.h.b16 %v129
    %v656 = vunpack.c.l.b16 %v130
    %v657 = vunpack.c.h.b16 %v130
    %v658 = vunpack.c.l.b16 %v131
    %v659 = vunpack.c.h.b16 %v131
    %v660 = vunpack.c.l.b16 %v132
    %v661 = vunpack.c.h.b16 %v132
    %v662 = vunpack.c.l.b16 %v133
    %v663 = vunpack.c.h.b16 %v133
    %v664 = vunpack.c.l.b16 %v134
    %v665 = vunpack.c.h.b16 %v134
    %v666 = vunpack.c.l.b16 %v135
    %v667 = vunpack.c.h.b16 %v135
    %v668 = vunpack.c.l.b16 %v136
    %v669 = vunpack.c.h.b16 %v136
    %v670 = vunpack.c.l.b16 %v137
    %v671 = vunpack.c.h.b16 %v137
    %v672 = vunpack.c.l.b16 %v138
    %v673 = vunpack.c.h.b16 %v138
    %v674 = vunpack.c.l.b16 %v139
    %v675 = vunpack.c.h.b16 %v139
    %v676 = vunpack.c.l.b16 %v140
    %v677 = vunpack.c.h.b16 %v140
    %v678 = vunpack.c.l.b16 %v141
    %v679 = vunpack.c.h.b16 %v141
    %v680 = vunpack.c.l.b16 %v142
    %v681 = vunpack.c.h.b16 %v142
    %v682 = vunpack.c.l.b16 %v143
    %v683 = vunpack.c.h.b16 %v143
    %v684 = vunpack.c.l.b16 %v144
    %v685 = vunpack.c.h.b16 %v144
    %v686 = vunpack.c.l.b16 %v145
    %v687 = vunpack.c.h.b16 %v145
    %v688 = vunpack.c.l.b16 %v146
    %v689 = vunpack.c.h.b16 %v146
    %v690 = vunpack.c.l.b16 %v147
    %v691 = vunpack.c.h.b16 %v147
    %v692 = vunpack.c.l.b16 %v148
    %v693 = vunpack.c.h.b16 %v148
    %v694 = vunpack.c.l.b16 %v149
    %v695 = vunpack.c.h.b16 %v149
    %v696 = vunpack.c.l.b16 %v150
    %v697 = vunpack.c.h.b16 %v150
    %v698 = vunpack.c.l.b16 %v151
    %v699 = vunpack.c.h.b16 %v151
    %v700 = vunpack.c.l.b16 %v152
    %v701 = vunpack.c.h.b16 %v152
    %v702 = vunpack.c.l.b16 %v153
    %v703 = vunpack.c.h.b16 %v153
    %v704 = vunpack.c.l.b16 %v154
    %v705 = vunpack.c.h.b16 %v154
    %v706 = vunpack.c.l.b16 %v155
    %v707 = vunpack.c.h.b16 %v155
    %v708 = vunpack.c.l.b16 %v156
    %v709 = vunpack.c.h.b16 %v156
    %v710 = vunpack.c.l.b16 %v157
    %v711 = vunpack.c.h.b16 %v157
    %v712 = vunpack.c.l.b16 %v158
    %v713 = vunpack.c.h.b16 %v158
    %v714 = vunpack.c.l.b16 %v159
    %v715 = vunpack.c.h.b16 %v159
    %v716 = vunpack.c.l.b16 %v160
    %v717 = vunpack.c.h.b16 %v160
    %v718 = vunpack.c.l.b16 %v161
    %v719 = vunpack.c.h.b16 %v161
    %v720 = vunpack.c.l.b16 %v162
    %v721 = vunpack.c.h.b16 %v162
    %v722 = vunpack.c.l.b16 %v163
    %v723 = vunpack.c.h.b16 %v163
    %v724 = vunpack.c.l.b16 %v164
    %v725 = vunpack.c.h.b16 %v164
    %v726 = vunpack.c.l.b16 %v165
    %v727 = vunpack.c.h.b16 %v165
    %v728 = vunpack.c.l.b16 %v166
    %v729 = vunpack.c.h.b16 %v166
    %v730 = vunpack.c.l.b16 %v167
    %v731 = vunpack.c.h.b16 %v167
    %v732 = vunpack.c.l.b16 %v168
    %v733 = vunpack.c.h.b16 %v168
    %v734 = vunpack.c.l.b16 %v169
    %v735 = vunpack.c.h.b16 %v169
    %v736 = vunpack.c.l.b16 %v170
    %v737 = vunpack.c.h.b16 %v170
    %v738 = vunpack.c.l.b16 %v171
    %v739 = vunpack.c.h.b16 %v171
    %v740 = vunpack.c.l.b16 %v172
    %v741 = vunpack.c.h.b16 %v172
    %v742 = vunpack.c.l.b16 %v173
    %v743 = vunpack.c.h.b16 %v173
    %v744 = vunpack.c.l.b16 %v174
    %v745 = vunpack.c.h.b16 %v174
    %v746 = vunpack.c.l.b16 %v175
    %v747 = vunpack.c.h.b16 %v175
    %v748 = vunpack.c.l.b16 %v176
    %v749 = vunpack.c.h.b16 %v176
    %v750 = vunpack.c.l.b16 %v177
    %v751 = vunpack.c.h.b16 %v177
    %v752 = vunpack.c.l.b16 %v178
    %v753 = vunpack.c.h.b16 %v178
    %v754 = vunpack.c.l.b16 %v179
    %v755 = vunpack.c.h.b16 %v179
    %v756 = vunpack.c.l.b16 %v180
    %v757 = vunpack.c.h.b16 %v180
    %v758 = vunpack.c.l.b16 %v181
    %v759 = vunpack.c.h.b16 %v181
    %v760 = vunpack.c.l.b16 %v182
    %v761 = vunpack.c.h.b16 %v182
    %v762 = vunpack.c.l.b16 %v183
    %v763 = vunpack.c.h.b16 %v183
    %v764 = vunpack.c.l.b16 %v184
    %v765 = vunpack.c.h.b16 %v184
    %v766 = vunpack.c.l.b16 %v185
    %v767 = vunpack.c.h.b16 %v185
    %v768 = vunpack.c.l.b16 %v186
    %v769 = vunpack.c.h.b16 %v186
    %v770 = vunpack.c.l.b16 %v187
    %v771 = vunpack.c.h.b16 %v187
    %v772 = vunpack.c.l.b16 %v188
    %v773 = vunpack.c.h.b16 %v188
    %v774 = vunpack.c.l.b16 %v189
    %v775 = vunpack.c.h.b16 %v189
    %v776 = vunpack.c.l.b16 %v190
    %v777 = vunpack.c.h.b16 %v190
    %v778 = vunpack.c.l.b16 %v191
    %v779 = vunpack.c.h.b16 %v191
    %v780 = vunpack.c.l.b16 %v192
    %v781 = vunpack.c.h.b16 %v192
    %v782 = vunpack.c.l.b16 %v193
    %v783 = vunpack.c.h.b16 %v193
    %v784 = vunpack.c.l.b16 %v194
    %v785 = vunpack.c.h.b16 %v194
    %v786 = vunpack.c.l.b16 %v195
    %v787 = vunpack.c.h.b16 %v195
    %v788 = vunpack.c.l.b16 %v196
    %v789 = vunpack.c.h.b16 %v196
    %v790 = vunpack.c.l.b16 %v197
    %v791 = vunpack.c.h.b16 %v197
    %v792 = vunpack.c.l.b16 %v198
    %v793 = vunpack.c.h.b16 %v198
    %v794 = vunpack.c.l.b16 %v199
    %v795 = vunpack.c.h.b16 %v199
    %v796 = vunpack.c.l.b16 %v200
    %v797 = vunpack.c.h.b16 %v200
    %v798 = vunpack.c.l.b16 %v201
    %v799 = vunpack.c.h.b16 %v201
    %v800 = vunpack.c.l.b16 %v202
    %v801 = vunpack.c.h.b16 %v202
    %v802 = vunpack.c.l.b16 %v203
    %v803 = vunpack.c.h.b16 %v203
    %v804 = vunpack.c.l.b16 %v204
    %v805 = vunpack.c.h.b16 %v204
    %v806 = vunpack.c.l.b16 %v205
    %v807 = vunpack.c.h.b16 %v205
    %v808 = vunpack.c.l.b16 %v206
    %v809 = vunpack.c.h.b16 %v206
    %v810 = vunpack.c.l.b16 %v207
    %v811 = vunpack.c.h.b16 %v207
    %v812 = vunpack.c.l.b16 %v208
    %v813 = vunpack.c.h.b16 %v208
    %v814 = vunpack.c.l.b16 %v209
    %v815 = vunpack.c.h.b16 %v209
    %v816 = vunpack.c.l.b16 %v210
    %v817 = vunpack.c.h.b16 %v210
    %v818 = vunpack.c.l.b16 %v211
    %v819 = vunpack.c.h.b16 %v211
    %v820 = vunpack.c.l.b16 %v212
    %v821 = vunpack.c.h.b16 %v212
    %v822 = vunpack.c.l.b16 %v213
    %v823 = vunpack.c.h.b16 %v213
    %v824 = vunpack.c.l.b16 %v214
    %v825 = vunpack.c.h.b16 %v214
    %v826 = vunpack.c.l.b16 %v215
    %v827 = vunpack.c.h.b16 %v215
    %v828 = vunpack.c.l.b16 %v216
    %v829 = vunpack.c.h.b16 %v216
    %v830 = vunpack.c.l.b16 %v217
    %v831 = vunpack.c.h.b16 %v217
    %v832 = vunpack.c.l.b16 %v218
    %v833 = vunpack.c.h.b16 %v218
    %v834 = vunpack.c.l.b16 %v219
    %v835 = vunpack.c.h.b16 %v219
    %v836 = vunpack.c.l.b16 %v220
    %v837 = vunpack.c.h.b16 %v220
    %v838 = vunpack.c.l.b16 %v221
    %v839 = vunpack.c.h.b16 %v221
    %v840 = vunpack.c.l.b16 %v222
    %v841 = vunpack.c.h.b16 %v222
    %v842 = vunpack.c.l.b16 %v223
    %v843 = vunpack.c.h.b16 %v223
    %v844 = vunpack.c.l.b16 %v224
    %v845 = vunpack.c.h.b16 %v224
    %v846 = vunpack.c.l.b16 %v225
    %v847 = vunpack.c.h.b16 %v225
    %v848 = vunpack.c.l.b16 %v226
    %v849 = vunpack.c.h.b16 %v226
    %v850 = vunpack.c.l.b16 %v227
    %v851 = vunpack.c.h.b16 %v227
    %v852 = vunpack.c.l.b16 %v228
    %v853 = vunpack.c.h.b16 %v228
    %v854 = vunpack.c.l.b16 %v229
    %v855 = vunpack.c.h.b16 %v229
    %v856 = vunpack.c.l.b16 %v230
    %v857 = vunpack.c.h.b16 %v230
    %v858 = vunpack.c.l.b16 %v231
    %v859 = vunpack.c.h.b16 %v231
    %v860 = vunpack.c.l.b16 %v232
    %v861 = vunpack.c.h.b16 %v232
    %v862 = vunpack.c.l.b16 %v233
    %v863 = vunpack.c.h.b16 %v233
    %v864 = vunpack.c.l.b16 %v234
    %v865 = vunpack.c.h.b16 %v234
    %v866 = vunpack.c.l.b16 %v235
    %v867 = vunpack.c.h.b16 %v235
    %v868 = vunpack.c.l.b16 %v236
    %v869 = vunpack.c.h.b16 %v236
    %v870 = vunpack.c.l.b16 %v237
    %v871 = vunpack.c.h.b16 %v237
    %v872 = vunpack.c.l.b16 %v238
    %v873 = vunpack.c.h.b16 %v238
    %v874 = vunpack.c.l.b16 %v239
    %v875 = vunpack.c.h.b16 %v239
    %v876 = vunpack.c.l.b16 %v240
    %v877 = vunpack.c.h.b16 %v240
    %v878 = vunpack.c.l.b16 %v241
    %v879 = vunpack.c.h.b16 %v241
    %v880 = vunpack.c.l.b16 %v242
    %v881 = vunpack.c.h.b16 %v242
    %v882 = vunpack.c.l.b16 %v243
    %v883 = vunpack.c.h.b16 %v243
    %v884 = vunpack.c.l.b16 %v244
    %v885 = vunpack.c.h.b16 %v244
    %v886 = vunpack.c.l.b16 %v245
    %v887 = vunpack.c.h.b16 %v245
    %v888 = vunpack.c.l.b16 %v246
    %v889 = vunpack.c.h.b16 %v246
    %v890 = vunpack.c.l.b16 %v247
    %v891 = vunpack.c.h.b16 %v247
    %v892 = vunpack.c.l.b16 %v248
    %v893 = vunpack.c.h.b16 %v248
    %v894 = vunpack.c.l.b16 %v249
    %v895 = vunpack.c.h.b16 %v249
    %v896 = vunpack.c.l.b16 %v250
    %v897 = vunpack.c.h.b16 %v250
    %v898 = vunpack.c.l.b16 %v251
    %v899 = vunpack.c.h.b16 %v251
    %v900 = vunpack.c.l.b16 %v252
    %v901 = vunpack.c.h.b16 %v252
    %v902 = vunpack.c.l.b16 %v253
    %v903 = vunpack.c.h.b16 %v253
    %v904 = vunpack.c.l.b16 %v254
    %v905 = vunpack.c.h.b16 %v254
    %v906 = vunpack.c.l.b16 %v255
    %v907 = vunpack.c.h.b16 %v255
    %v908 = vunpack.c.l.b16 %v256
    %v909 = vunpack.c.h.b16 %v256
    %v910 = vunpack.c.l.b16 %v257
    %v911 = vunpack.c.h.b16 %v257
    %v912 = vunpack.c.l.b16 %v258
    %v913 = vunpack.c.h.b16 %v258
    %v914 = vunpack.c.l.b16 %v259
    %v915 = vunpack.c.h.b16 %v259
    %v916 = vunpack.c.l.b16 %v260
    %v917 = vunpack.c.h.b16 %v260
    %v918 = vunpack.c.l.b16 %v261
    %v919 = vunpack.c.h.b16 %v261
    %v920 = vunpack.c.l.b16 %v262
    %v921 = vunpack.c.h.b16 %v262
    %v922 = vunpack.c.l.b16 %v263
    %v923 = vunpack.c.h.b16 %v263
    %v924 = vunpack.c.l.b16 %v264
    %v925 = vunpack.c.h.b16 %v264
    %v926 = vunpack.c.l.b16 %v265
    %v927 = vunpack.c.h.b16 %v265
    %v928 = vunpack.c.l.b16 %v266
    %v929 = vunpack.c.h.b16 %v266
    %v930 = vunpack.c.l.b16 %v267
    %v931 = vunpack.c.h.b16 %v267
    %v932 = vunpack.c.l.b16 %v268
    %v933 = vunpack.c.h.b16 %v268
    %v934 = vunpack.c.l.b16 %v269
    %v935 = vunpack.c.h.b16 %v269
    %v936 = vunpack.c.l.b16 %v270
    %v937 = vunpack.c.h.b16 %v270
    %v938 = vunpack.c.l.b16 %v271
    %v939 = vunpack.c.h.b16 %v271
    %v940 = vunpack.c.l.b16 %v272
    %v941 = vunpack.c.h.b16 %v272
    %v942 = vunpack.c.l.b16 %v273
    %v943 = vunpack.c.h.b16 %v273
    %v944 = vunpack.c.l.b16 %v274
    %v945 = vunpack.c.h.b16 %v274
    %v946 = vunpack.c.l.b16 %v275
    %v947 = vunpack.c.h.b16 %v275
    %v948 = vunpack.c.l.b16 %v276
    %v949 = vunpack.c.h.b16 %v276
    %v950 = vunpack.c.l.b16 %v277
    %v951 = vunpack.c.h.b16 %v277
    %v952 = vunpack.c.l.b16 %v278
    %v953 = vunpack.c.h.b16 %v278
    %v954 = vunpack.c.l.b16 %v279
    %v955 = vunpack.c.h.b16 %v279
    %v956 = vunpack.c.l.b16 %v280
    %v957 = vunpack.c.h.b16 %v280
    %v958 = vunpack.c.l.b16 %v281
    %v959 = vunpack.c.h.b16 %v281
    %v960 = vunpack.c.l.b16 %v282
    %v961 = vunpack.c.h.b16 %v282
    %v962 = vunpack.c.l.b16 %v283
    %v963 = vunpack.c.h.b16 %v283
    %v964 = vunpack.c.l.b16 %v284
    %v965 = vunpack.c.h.b16 %v284
    %v966 = vunpack.c.l.b16 %v285
    %v967 = vunpack.c.h.b16 %v285
    %v968 = vunpack.c.l.b16 %v286
    %v969 = vunpack.c.h.b16 %v286
    %v970 = vunpack.c.l.b16 %v287
    %v971 = vunpack.c.h.b16 %v287
    %v972 = vunpack.c.l.b16 %v288
    %v973 = vunpack.c.h.b16 %v288
    %v974 = vunpack.c.l.b16 %v289
    %v975 = vunpack.c.h.b16 %v289
    %v976 = vunpack.c.l.b16 %v290
    %v977 = vunpack.c.h.b16 %v290
    %v978 = vunpack.c.l.b16 %v291
    %v979 = vunpack.c.h.b16 %v291
    %v980 = vunpack.c.l.b16 %v292
    %v981 = vunpack.c.h.b16 %v292
    %v982 = vunpack.c.l.b16 %v293
    %v983 = vunpack.c.h.b16 %v293
    %v984 = vunpack.c.l.b16 %v294
    %v985 = vunpack.c.h.b16 %v294
    %v986 = vunpack.c.l.b16 %v295
    %v987 = vunpack.c.h.b16 %v295
    %v988 = vunpack.c.l.b16 %v296
    %v989 = vunpack.c.h.b16 %v296
    %v990 = vunpack.c.l.b16 %v297
    %v991 = vunpack.c.h.b16 %v297
    %v992 = vunpack.c.l.b16 %v298
    %v993 = vunpack.c.h.b16 %v298
    %v994 = vunpack.c.l.b16 %v299
    %v995 = vunpack.c.h.b16 %v299
    %v996 = vunpack.c.l.b16 %v300
    %v997 = vunpack.c.h.b16 %v300
    %v998 = vunpack.c.l.b16 %v301
    %v999 = vunpack.c.h.b16 %v301
    %v1000 = vunpack.c.l.b16 %v302
    %v1001 = vunpack.c.h.b16 %v302
    %v1002 = vunpack.c.l.b16 %v303
    %v1003 = vunpack.c.h.b16 %v303
    %v1004 = vunpack.c.l.b16 %v304
    %v1005 = vunpack.c.h.b16 %v304
    %v1006 = vunpack.c.l.b16 %v305
    %v1007 = vunpack.c.h.b16 %v305
    %v1008 = vunpack.c.l.b16 %v306
    %v1009 = vunpack.c.h.b16 %v306
    %v1010 = vunpack.c.l.b16 %v307
    %v1011 = vunpack.c.h.b16 %v307
    %v1012 = vunpack.c.l.b16 %v308
    %v1013 = vunpack.c.h.b16 %v308
    %v1014 = vunpack.c.l.b16 %v309
    %v1015 = vunpack.c.h.b16 %v309
    %v1016 = vunpack.c.l.b16 %v310
    %v1017 = vunpack.c.h.b16 %v310
    %v1018 = vunpack.c.l.b16 %v311
    %v1019 = vunpack.c.h.b16 %v311
    %v1020 = vunpack.c.l.b16 %v312
    %v1021 = vunpack.c.h.b16 %v312
    %v1022 = vunpack.c.l.b16 %v313
    %v1023 = vunpack.c.h.b16 %v313
    %v1024 = vunpack.c.l.b16 %v314
    %v1025 = vunpack.c.h.b16 %v314
    %v1026 = vunpack.c.l.b16 %v315
    %v1027 = vunpack.c.h.b16 %v315
    %v1028 = vunpack.c.l.b16 %v316
    %v1029 = vunpack.c.h.b16 %v316
    %v1030 = vunpack.c.l.b16 %v317
    %v1031 = vunpack.c.h.b16 %v317
    %v1032 = vunpack.c.l.b16 %v318
    %v1033 = vunpack.c.h.b16 %v318
    %v1034 = vunpack.c.l.b16 %v319
    %v1035 = vunpack.c.h.b16 %v319
    %v1036 = vunpack.c.l.b16 %v320
    %v1037 = vunpack.c.h.b16 %v320
    %v1038 = vunpack.c.l.b16 %v321
    %v1039 = vunpack.c.h.b16 %v321
    %v1040 = vunpack.c.l.b16 %v322
    %v1041 = vunpack.c.h.b16 %v322
    %v1042 = vunpack.c.l.b16 %v323
    %v1043 = vunpack.c.h.b16 %v323
    %v1044 = vunpack.c.l.b16 %v324
    %v1045 = vunpack.c.h.b16 %v324
    %v1046 = vunpack.c.l.b16 %v325
    %v1047 = vunpack.c.h.b16 %v325
    %v1048 = vunpack.c.l.b16 %v326
    %v1049 = vunpack.c.h.b16 %v326
    %v1050 = vunpack.c.l.b16 %v327
    %v1051 = vunpack.c.h.b16 %v327
    %v1052 = vunpack.c.l.b16 %v328
    %v1053 = vunpack.c.h.b16 %v328
    %v1054 = vunpack.c.l.b16 %v329
    %v1055 = vunpack.c.h.b16 %v329
    %v1056 = vunpack.c.l.b16 %v330
    %v1057 = vunpack.c.h.b16 %v330
    %v1058 = vunpack.c.l.b16 %v331
    %v1059 = vunpack.c.h.b16 %v331
    %v1060 = vunpack.c.l.b16 %v332
    %v1061 = vunpack.c.h.b16 %v332
    %v1062 = vunpack.c.l.b16 %v333
    %v1063 = vunpack.c.h.b16 %v333
    %v1064 = vunpack.c.l.b16 %v334
    %v1065 = vunpack.c.h.b16 %v334
    %v1066 = vunpack.c.l.b16 %v335
    %v1067 = vunpack.c.h.b16 %v335
    %v1068 = vunpack.c.l.b16 %v336
    %v1069 = vunpack.c.h.b16 %v336
    %v1070 = vunpack.c.l.b16 %v337
    %v1071 = vunpack.c.h.b16 %v337
    %v1072 = vunpack.c.l.b16 %v338
    %v1073 = vunpack.c.h.b16 %v338
    %v1074 = vunpack.c.l.b16 %v339
    %v1075 = vunpack.c.h.b16 %v339
    %v1076 = vunpack.c.l.b16 %v340
    %v1077 = vunpack.c.h.b16 %v340
    %v1078 = vunpack.c.l.b16 %v341
    %v1079 = vunpack.c.h.b16 %v341
    %v1080 = vunpack.c.l.b16 %v342
    %v1081 = vunpack.c.h.b16 %v342
    %v1082 = vunpack.c.l.b16 %v343
    %v1083 = vunpack.c.h.b16 %v343
    %v1084 = vunpack.c.l.b16 %v344
    %v1085 = vunpack.c.h.b16 %v344
    %v1086 = vunpack.c.l.b16 %v345
    %v1087 = vunpack.c.h.b16 %v345
    %v1088 = vunpack.c.l.b16 %v346
    %v1089 = vunpack.c.h.b16 %v346
    %v1090 = vunpack.c.l.b16 %v347
    %v1091 = vunpack.c.h.b16 %v347
    %v1092 = vunpack.c.l.b16 %v348
    %v1093 = vunpack.c.h.b16 %v348
    %v1094 = vunpack.c.l.b16 %v349
    %v1095 = vunpack.c.h.b16 %v349
    %v1096 = vunpack.c.l.b16 %v350
    %v1097 = vunpack.c.h.b16 %v350
    %v1098 = vunpack.c.l.b16 %v351
    %v1099 = vunpack.c.h.b16 %v351
    %v1100 = vunpack.c.l.b16 %v352
    %v1101 = vunpack.c.h.b16 %v352
    %v1102 = vunpack.c.l.b16 %v353
    %v1103 = vunpack.c.h.b16 %v353
    %v1104 = vunpack.c.l.b16 %v354
    %v1105 = vunpack.c.h.b16 %v354
    %v1106 = vunpack.c.l.b16 %v355
    %v1107 = vunpack.c.h.b16 %v355
    %v1108 = vunpack.c.l.b16 %v356
    %v1109 = vunpack.c.h.b16 %v356
    %v1110 = vunpack.c.l.b16 %v357
    %v1111 = vunpack.c.h.b16 %v357
    %v1112 = vunpack.c.l.b16 %v358
    %v1113 = vunpack.c.h.b16 %v358
    %v1114 = vunpack.c.l.b16 %v359
    %v1115 = vunpack.c.h.b16 %v359
    %v1116 = vunpack.c.l.b16 %v360
    %v1117 = vunpack.c.h.b16 %v360
    %v1118 = vunpack.c.l.b16 %v361
    %v1119 = vunpack.c.h.b16 %v361
    %v1120 = vunpack.c.l.b16 %v362
    %v1121 = vunpack.c.h.b16 %v362
    %v1122 = vunpack.c.l.b16 %v363
    %v1123 = vunpack.c.h.b16 %v363
    %v1124 = vunpack.c.l.b16 %v364
    %v1125 = vunpack.c.h.b16 %v364
    %v1126 = vunpack.c.l.b16 %v365
    %v1127 = vunpack.c.h.b16 %v365
    %v1128 = vunpack.c.l.b16 %v366
    %v1129 = vunpack.c.h.b16 %v366
    %v1130 = vunpack.c.l.b16 %v367
    %v1131 = vunpack.c.h.b16 %v367
    %v1132 = vunpack.c.l.b16 %v368
    %v1133 = vunpack.c.h.b16 %v368
    %v1134 = vunpack.c.l.b16 %v369
    %v1135 = vunpack.c.h.b16 %v369
    %v1136 = vunpack.c.l.b16 %v370
    %v1137 = vunpack.c.h.b16 %v370
    %v1138 = vunpack.c.l.b16 %v371
    %v1139 = vunpack.c.h.b16 %v371
    %v1140 = vunpack.c.l.b16 %v372
    %v1141 = vunpack.c.h.b16 %v372
    %v1142 = vunpack.c.l.b16 %v373
    %v1143 = vunpack.c.h.b16 %v373
    %v1144 = vunpack.c.l.b16 %v374
    %v1145 = vunpack.c.h.b16 %v374
    %v1146 = vunpack.c.l.b16 %v375
    %v1147 = vunpack.c.h.b16 %v375
    %v1148 = vunpack.c.l.b16 %v376
    %v1149 = vunpack.c.h.b16 %v376
    %v1150 = vunpack.c.l.b16 %v377
    %v1151 = vunpack.c.h.b16 %v377
    %v1152 = vunpack.c.l.b16 %v378
    %v1153 = vunpack.c.h.b16 %v378
    %v1154 = vunpack.c.l.b16 %v379
    %v1155 = vunpack.c.h.b16 %v379
    %v1156 = vunpack.c.l.b16 %v380
    %v1157 = vunpack.c.h.b16 %v380
    %v1158 = vpack.c.b16 %v650, %v646
    %v1159 = vpack.c.b16 %v651, %v647
    %v1160 = vpack.c.b16 %v652, %v648
    %v1161 = vpack.c.b16 %v653, %v649
    %v1162 = vpack.c.b16 %v658, %v654
    %v1163 = vpack.c.b16 %v659, %v655
    %v1164 = vpack.c.b16 %v660, %v656
    %v1165 = vpack.c.b16 %v661, %v657
    %v1166 = vpack.c.b16 %v666, %v662
    %v1167 = vpack.c.b16 %v667, %v663
    %v1168 = vpack.c.b16 %v668, %v664
    %v1169 = vpack.c.b16 %v669, %v665
    %v1170 = vpack.c.b16 %v674, %v670
    %v1171 = vpack.c.b16 %v675, %v671
    %v1172 = vpack.c.b16 %v676, %v672
    %v1173 = vpack.c.b16 %v677, %v673
    %v1174 = vpack.c.b16 %v682, %v678
    %v1175 = vpack.c.b16 %v683, %v679
    %v1176 = vpack.c.b16 %v684, %v680
    %v1177 = vpack.c.b16 %v685, %v681
    %v1178 = vpack.c.b16 %v690, %v686
    %v1179 = vpack.c.b16 %v691, %v687
    %v1180 = vpack.c.b16 %v692, %v688
    %v1181 = vpack.c.b16 %v693, %v689
    %v1182 = vpack.c.b16 %v698, %v694
    %v1183 = vpack.c.b16 %v699, %v695
    %v1184 = vpack.c.b16 %v700, %v696
    %v1185 = vpack.c.b16 %v701, %v697
    %v1186 = vpack.c.b16 %v706, %v702
    %v1187 = vpack.c.b16 %v707, %v703
    %v1188 = vpack.c.b16 %v708, %v704
    %v1189 = vpack.c.b16 %v709, %v705
    %v1190 = vpack.c.b16 %v714, %v710
    %v1191 = vpack.c.b16 %v715, %v711
    %v1192 = vpack.c.b16 %v716, %v712
    %v1193 = vpack.c.b16 %v717, %v713
    %v1194 = vpack.c.b16 %v722, %v718
    %v1195 = vpack.c.b16 %v723, %v719
    %v1196 = vpack.c.b16 %v724, %v720
    %v1197 = vpack.c.b16 %v725, %v721
    %v1198 = vpack.c.b16 %v730, %v726
    %v1199 = vpack.c.b16 %v731, %v727
    %v1200 = vpack.c.b16 %v732, %v728
    %v1201 = vpack.c.b16 %v733, %v729
    %v1202 = vpack.c.b16 %v738, %v734
    %v1203 = vpack.c.b16 %v739, %v735
    %v1204 = vpack.c.b16 %v740, %v736
    %v1205 = vpack.c.b16 %v741, %v737
    %v1206 = vpack.c.b16 %v746, %v742
    %v1207 = vpack.c.b16 %v747, %v743
    %v1208 = vpack.c.b16 %v748, %v744
    %v1209 = vpack.c.b16 %v749, %v745
    %v1210 = vpack.c.b16 %v754, %v750
    %v1211 = vpack.c.b16 %v755, %v751
    %v1212 = vpack.c.b16 %v756, %v752
    %v1213 = vpack.c.b16 %v757, %v753
    %v1214 = vpack.c.b16 %v762, %v758
    %v1215 = vpack.c.b16 %v763, %v759
    %v1216 = vpack.c.b16 %v764, %v760
    %v1217 = vpack.c.b16 %v765, %v761
    %v1218 = vpack.c.b16 %v770, %v766
    %v1219 = vpack.c.b16 %v771, %v767
    %v1220 = vpack.c.b16 %v772, %v768
    %v1221 = vpack.c.b16 %v773, %v769
    %v1222 = vpack.c.b16 %v778, %v774
    %v1223 = vpack.c.b16 %v779, %v775
    %v1224 = vpack.c.b16 %v780, %v776
    %v1225 = vpack.c.b16 %v781, %v777
    %v1226 = vpack.c.b16 %v786, %v782
    %v1227 = vpack.c.b16 %v787, %v783
    %v1228 = vpack.c.b16 %v788, %v784
    %v1229 = vpack.c.b16 %v789, %v785
    %v1230 = vpack.c.b16 %v794, %v790
    %v1231 = vpack.c.b16 %v795, %v791
    %v1232 = vpack.c.b16 %v796, %v792
    %v1233 = vpack.c.b16 %v797, %v793
    %v1234 = vpack.c.b16 %v802, %v798
    %v1235 = vpack.c.b16 %v803, %v799
    %v1236 = vpack.c.b16 %v804, %v800
    %v1237 = vpack.c.b16 %v805, %v801
    %v1238 = vpack.c.b16 %v810, %v806
    %v1239 = vpack.c.b16 %v811, %v807
    %v1240 = vpack.c.b16 %v812, %v808
    %v1241 = vpack.c.b16 %v813, %v809
    %v1242 = vpack.c.b16 %v818, %v814
    %v1243 = vpack.c.b16 %v819, %v815
    %v1244 = vpack.c.b16 %v820, %v816
    %v1245 = vpack.c.b16 %v821, %v817
    %v1246 = vpack.c.b16 %v826, %v822
    %v1247 = vpack.c.b16 %v827, %v823
    %v1248 = vpack.c.b16 %v828, %v824
    %v1249 = vpack.c.b16 %v829, %v825
    %v1250 = vpack.c.b16 %v834, %v830
    %v1251 = vpack.c.b16 %v835, %v831
    %v1252 = vpack.c.b16 %v836, %v832
    %v1253 = vpack.c.b16 %v837, %v833
    %v1254 = vpack.c.b16 %v842, %v838
    %v1255 = vpack.c.b16 %v843, %v839
    %v1256 = vpack.c.b16 %v844, %v840
    %v1257 = vpack.c.b16 %v845, %v841
    %v1258 = vpack.c.b16 %v850, %v846
    %v1259 = vpack.c.b16 %v851, %v847
    %v1260 = vpack.c.b16 %v852, %v848
    %v1261 = vpack.c.b16 %v853, %v849
    %v1262 = vpack.c.b16 %v858, %v854
    %v1263 = vpack.c.b16 %v859, %v855
    %v1264 = vpack.c.b16 %v860, %v856
    %v1265 = vpack.c.b16 %v861, %v857
    %v1266 = vpack.c.b16 %v866, %v862
    %v1267 = vpack.c.b16 %v867, %v863
    %v1268 = vpack.c.b16 %v868, %v864
    %v1269 = vpack.c.b16 %v869, %v865
    %v1270 = vpack.c.b16 %v874, %v870
    %v1271 = vpack.c.b16 %v875, %v871
    %v1272 = vpack.c.b16 %v876, %v872
    %v1273 = vpack.c.b16 %v877, %v873
    %v1274 = vpack.c.b16 %v882, %v878
    %v1275 = vpack.c.b16 %v883, %v879
    %v1276 = vpack.c.b16 %v884, %v880
    %v1277 = vpack.c.b16 %v885, %v881
    %v1278 = vpack.c.b16 %v890, %v886
    %v1279 = vpack.c.b16 %v891, %v887
    %v1280 = vpack.c.b16 %v892, %v888
    %v1281 = vpack.c.b16 %v893, %v889
    %v1282 = vpack.c.b16 %v898, %v894
    %v1283 = vpack.c.b16 %v899, %v895
    %v1284 = vpack.c.b16 %v900, %v896
    %v1285 = vpack.c.b16 %v901, %v897
    %v1286 = vpack.c.b16 %v906, %v902
    %v1287 = vpack.c.b16 %v907, %v903
    %v1288 = vpack.c.b16 %v908, %v904
    %v1289 = vpack.c.b16 %v909, %v905
    %v1290 = vpack.c.b16 %v914, %v910
    %v1291 = vpack.c.b16 %v915, %v911
    %v1292 = vpack.c.b16 %v916, %v912
    %v1293 = vpack.c.b16 %v917, %v913
    %v1294 = vpack.c.b16 %v922, %v918
    %v1295 = vpack.c.b16 %v923, %v919
    %v1296 = vpack.c.b16 %v924, %v920
    %v1297 = vpack.c.b16 %v925, %v921
    %v1298 = vpack.c.b16 %v930, %v926
    %v1299 = vpack.c.b16 %v931, %v927
    %v1300 = vpack.c.b16 %v932, %v928
    %v1301 = vpack.c.b16 %v933, %v929
    %v1302 = vpack.c.b16 %v938, %v934
    %v1303 = vpack.c.b16 %v939, %v935
    %v1304 = vpack.c.b16 %v940, %v936
    %v1305 = vpack.c.b16 %v941, %v937
    %v1306 = vpack.c.b16 %v946, %v942
    %v1307 = vpack.c.b16 %v947, %v943
    %v1308 = vpack.c.b16 %v948, %v944
    %v1309 = vpack.c.b16 %v949, %v945
    %v1310 = vpack.c.b16 %v954, %v950
    %v1311 = vpack.c.b16 %v955, %v951
    %v1312 = vpack.c.b16 %v956, %v952
    %v1313 = vpack.c.b16 %v957, %v953
    %v1314 = vpack.c.b16 %v962, %v958
    %v1315 = vpack.c.b16 %v963, %v959
    %v1316 = vpack.c.b16 %v964, %v960
    %v1317 = vpack.c.b16 %v965, %v961
    %v1318 = vpack.c.b16 %v970, %v966
    %v1319 = vpack.c.b16 %v971, %v967
    %v1320 = vpack.c.b16 %v972, %v968
    %v1321 = vpack.c.b16 %v973, %v969
    %v1322 = vpack.c.b16 %v978, %v974
    %v1323 = vpack.c.b16 %v979, %v975
    %v1324 = vpack.c.b16 %v980, %v976
    %v1325 = vpack.c.b16 %v981, %v977
    %v1326 = vpack.c.b16 %v986, %v982
    %v1327 = vpack.c.b16 %v987, %v983
    %v1328 = vpack.c.b16 %v988, %v984
    %v1329 = vpack.c.b16 %v989, %v985
    %v1330 = vpack.c.b16 %v994, %v990
    %v1331 = vpack.c.b16 %v995, %v991
    %v1332 = vpack.c.b16 %v996, %v992
    %v1333 = vpack.c.b16 %v997, %v993
    %v1334 = vpack.c.b16 %v1002, %v998
    %v1335 = vpack.c.b16 %v1003, %v999
    %v1336 = vpack.c.b16 %v1004, %v1000
    %v1337 = vpack.c.b16 %v1005, %v1001
    %v1338 = vpack.c.b16 %v1010, %v1006
    %v1339 = vpack.c.b16 %v1011, %v1007
    %v1340 = vpack.c.b16 %v1012, %v1008
    %v1341 = vpack.c.b16 %v1013, %v1009
    %v1342 = vpack.c.b16 %v1018, %v1014
    %v1343 = vpack.c.b16 %v1019, %v1015
    %v1344 = vpack.c.b16 %v1020, %v1016
    %v1345 = vpack.c.b16 %v1021, %v1017
    %v1346 = vpack.c.b16 %v1026, %v1022
    %v1347 = vpack.c.b16 %v1027, %v1023
    %v1348 = vpack.c.b16 %v1028, %v1024
    %v1349 = vpack.c.b16 %v1029, %v1025
    %v1350 = vpack.c.b16 %v1034, %v1030
    %v1351 = vpack.c.b16 %v1035, %v1031
    %v1352 = vpack.c.b16 %v1036, %v1032
    %v1353 = vpack.c.b16 %v1037, %v1033
    %v1354 = vpack.c.b16 %v1042, %v1038
    %v1355 = vpack.c.b16 %v1043, %v1039
    %v1356 = vpack.c.b16 %v1044, %v1040
    %v1357 = vpack.c.b16 %v1045, %v1041
    %v1358 = vpack.c.b16 %v1050, %v1046
    %v1359 = vpack.c.b16 %v1051, %v1047
    %v1360 = vpack.c.b16 %v1052, %v1048
    %v1361 = vpack.c.b16 %v1053, %v1049
    %v1362 = vpack.c.b16 %v1058, %v1054
    %v1363 = vpack.c.b16 %v1059, %v1055
    %v1364 = vpack.c.b16 %v1060, %v1056
    %v1365 = vpack.c.b16 %v1061, %v1057
    %v1366 = vpack.c.b16 %v1066, %v1062
    %v1367 = vpack.c.b16 %v1067, %v1063
    %v1368 = vpack.c.b16 %v1068, %v1064
    %v1369 = vpack.c.b16 %v1069, %v1065
    %v1370 = vpack.c.b16 %v1074, %v1070
    %v1371 = vpack.c.b16 %v1075, %v1071
    %v1372 = vpack.c.b16 %v1076, %v1072
    %v1373 = vpack.c.b16 %v1077, %v1073
    %v1374 = vpack.c.b16 %v1082, %v1078
    %v1375 = vpack.c.b16 %v1083, %v1079
    %v1376 = vpack.c.b16 %v1084, %v1080
    %v1377 = vpack.c.b16 %v1085, %v1081
    %v1378 = vpack.c.b16 %v1090, %v1086
    %v1379 = vpack.c.b16 %v1091, %v1087
    %v1380 = vpack.c.b16 %v1092, %v1088
    %v1381 = vpack.c.b16 %v1093, %v1089
    %v1382 = vpack.c.b16 %v1098, %v1094
    %v1383 = vpack.c.b16 %v1099, %v1095
    %v1384 = vpack.c.b16 %v1100, %v1096
    %v1385 = vpack.c.b16 %v1101, %v1097
    %v1386 = vpack.c.b16 %v1106, %v1102
    %v1387 = vpack.c.b16 %v1107, %v1103
    %v1388 = vpack.c.b16 %v1108, %v1104
    %v1389 = vpack.c.b16 %v1109, %v1105
    %v1390 = vpack.c.b16 %v1114, %v1110
    %v1391 = vpack.c.b16 %v1115, %v1111
    %v1392 = vpack.c.b16 %v1116, %v1112
    %v1393 = vpack.c.b16 %v1117, %v1113
    %v1394 = vpack.c.b16 %v1122, %v1118
    %v1395 = vpack.c.b16 %v1123, %v1119
    %v1396 = vpack.c.b16 %v1124, %v1120
    %v1397 = vpack.c.b16 %v1125, %v1121
    %v1398 = vpack.c.b16 %v1130, %v1126
    %v1399 = vpack.c.b16 %v1131, %v1127
    %v1400 = vpack.c.b16 %v1132, %v1128
    %v1401 = vpack.c.b16 %v1133, %v1129
    %v1402 = vpack.c.b16 %v1138, %v1134
    %v1403 = vpack.c.b16 %v1139, %v1135
    %v1404 = vpack.c.b16 %v1140, %v1136
    %v1405 = vpack.c.b16 %v1141, %v1137
    %v1406 = vpack.c.b16 %v1146, %v1142
    %v1407 = vpack.c.b16 %v1147, %v1143
    %v1408 = vpack.c.b16 %v1148, %v1144
    %v1409 = vpack.c.b16 %v1149, %v1145
    %v1410 = vpack.c.b16 %v1154, %v1150
    %v1411 = vpack.c.b16 %v1155, %v1151
    %v1412 = vpack.c.b16 %v1156, %v1152
    %v1413 = vpack.c.b16 %v1157, %v1153
    %1670 = vmatpush.bf16.msra.mxu0 %v1186
    %1671 = vmatpush.bf16.msra.mxu0 %v1182
    %1672 = vmatpush.bf16.msra.mxu0 %v1178
    %1673 = vmatpush.bf16.msra.mxu0 %v1174
    %1674 = vmatpush.bf16.msra.mxu0 %v1170
    %1675 = vmatpush.bf16.msra.mxu0 %v1166
    %1676 = vmatpush.bf16.msra.mxu0 %v1162
    %1677 = vmatpush.bf16.msra.mxu0 %v1158
    %1678 = vmatmul.bf16.gmra.mxu0 %v117
    %v1679 = vpop.f32.mrf.mxu0
    %v1680 = vadd.f32 %v382, %v1679
    %v1681 = vpop.f32.mrf.mxu0
    %1682 = vdwg.mxu0
    %1683 = vmatpush.bf16.msra.mxu0 %v1218
    %1684 = vmatpush.bf16.msra.mxu0 %v1214
    %1685 = vmatpush.bf16.msra.mxu0 %v1210
    %1686 = vmatpush.bf16.msra.mxu0 %v1206
    %1687 = vmatpush.bf16.msra.mxu0 %v1202
    %1688 = vmatpush.bf16.msra.mxu0 %v1198
    %1689 = vmatpush.bf16.msra.mxu0 %v1194
    %1690 = vmatpush.bf16.msra.mxu0 %v1190
    %1691 = vmatmul.bf16.gmra.mxu0 %v118
    %v1692 = vpop.f32.mrf.mxu0
    %v1693 = vadd.f32 %v1680, %v1692
    %v1694 = vpop.f32.mrf.mxu0
    %1695 = vdwg.mxu0
    %1696 = vmatpush.bf16.msra.mxu0 %v1250
    %1697 = vmatpush.bf16.msra.mxu0 %v1246
    %1698 = vmatpush.bf16.msra.mxu0 %v1242
    %1699 = vmatpush.bf16.msra.mxu0 %v1238
    %1700 = vmatpush.bf16.msra.mxu0 %v1234
    %1701 = vmatpush.bf16.msra.mxu0 %v1230
    %1702 = vmatpush.bf16.msra.mxu0 %v1226
    %1703 = vmatpush.bf16.msra.mxu0 %v1222
    %1704 = vmatmul.bf16.gmra.mxu0 %v119
    %v1705 = vpop.f32.mrf.mxu0
    %v1706 = vadd.f32 %v1693, %v1705
    %v1707 = vpop.f32.mrf.mxu0
    %1708 = vdwg.mxu0
    %1709 = vmatpush.bf16.msra.mxu0 %v1282
    %1710 = vmatpush.bf16.msra.mxu0 %v1278
    %1711 = vmatpush.bf16.msra.mxu0 %v1274
    %1712 = vmatpush.bf16.msra.mxu0 %v1270
    %1713 = vmatpush.bf16.msra.mxu0 %v1266
    %1714 = vmatpush.bf16.msra.mxu0 %v1262
    %1715 = vmatpush.bf16.msra.mxu0 %v1258
    %1716 = vmatpush.bf16.msra.mxu0 %v1254
    %1717 = vmatmul.bf16.gmra.mxu0 %v120
    %v1718 = vpop.f32.mrf.mxu0
    %v1719 = vadd.f32 %v1706, %v1718
    %v1720 = vpop.f32.mrf.mxu0
    %1721 = vdwg.mxu0
    %1722 = vmatpush.bf16.msra.mxu0 %v1314
    %1723 = vmatpush.bf16.msra.mxu0 %v1310
    %1724 = vmatpush.bf16.msra.mxu0 %v1306
    %1725 = vmatpush.bf16.msra.mxu0 %v1302
    %1726 = vmatpush.bf16.msra.mxu0 %v1298
    %1727 = vmatpush.bf16.msra.mxu0 %v1294
    %1728 = vmatpush.bf16.msra.mxu0 %v1290
    %1729 = vmatpush.bf16.msra.mxu0 %v1286
    %1730 = vmatmul.bf16.gmra.mxu0 %v121
    %v1731 = vpop.f32.mrf.mxu0
    %v1732 = vadd.f32 %v1719, %v1731
    %v1733 = vpop.f32.mrf.mxu0
    %1734 = vdwg.mxu0
    %1735 = vmatpush.bf16.msra.mxu0 %v1346
    %1736 = vmatpush.bf16.msra.mxu0 %v1342
    %1737 = vmatpush.bf16.msra.mxu0 %v1338
    %1738 = vmatpush.bf16.msra.mxu0 %v1334
    %1739 = vmatpush.bf16.msra.mxu0 %v1330
    %1740 = vmatpush.bf16.msra.mxu0 %v1326
    %1741 = vmatpush.bf16.msra.mxu0 %v1322
    %1742 = vmatpush.bf16.msra.mxu0 %v1318
    %1743 = vmatmul.bf16.gmra.mxu0 %v122
    %v1744 = vpop.f32.mrf.mxu0
    %v1745 = vadd.f32 %v1732, %v1744
    %v1746 = vpop.f32.mrf.mxu0
    %1747 = vdwg.mxu0
    %1748 = vmatpush.bf16.msra.mxu0 %v1378
    %1749 = vmatpush.bf16.msra.mxu0 %v1374
    %1750 = vmatpush.bf16.msra.mxu0 %v1370
    %1751 = vmatpush.bf16.msra.mxu0 %v1366
    %1752 = vmatpush.bf16.msra.mxu0 %v1362
    %1753 = vmatpush.bf16.msra.mxu0 %v1358
    %1754 = vmatpush.bf16.msra.mxu0 %v1354
    %1755 = vmatpush.bf16.msra.mxu0 %v1350
    %1756 = vmatmul.bf16.gmra.mxu0 %v123
    %v1757 = vpop.f32.mrf.mxu0
    %v1758 = vadd.f32 %v1745, %v1757
    %v1759 = vpop.f32.mrf.mxu0
    %1760 = vdwg.mxu0
    %1761 = vmatpush.bf16.msra.mxu0 %v1410
    %1762 = vmatpush.bf16.msra.mxu0 %v1406
    %1763 = vmatpush.bf16.msra.mxu0 %v1402
    %1764 = vmatpush.bf16.msra.mxu0 %v1398
    %1765 = vmatpush.bf16.msra.mxu0 %v1394
    %1766 = vmatpush.bf16.msra.mxu0 %v1390
    %1767 = vmatpush.bf16.msra.mxu0 %v1386
    %1768 = vmatpush.bf16.msra.mxu0 %v1382
    %1769 = vmatmul.bf16.gmra.mxu0 %v124
    %v1770 = vpop.f32.mrf.mxu0
    %v1771 = vadd.f32 %v1758, %v1770
    %v1772 = vpop.f32.mrf.mxu0
    %1773 = vdwg.mxu0
    %1774 = vmatpush.bf16.msra.mxu0 %v1187
    %1775 = vmatpush.bf16.msra.mxu0 %v1183
    %1776 = vmatpush.bf16.msra.mxu0 %v1179
    %1777 = vmatpush.bf16.msra.mxu0 %v1175
    %1778 = vmatpush.bf16.msra.mxu0 %v1171
    %1779 = vmatpush.bf16.msra.mxu0 %v1167
    %1780 = vmatpush.bf16.msra.mxu0 %v1163
    %1781 = vmatpush.bf16.msra.mxu0 %v1159
    %1782 = vmatmul.bf16.gmra.mxu0 %v117
    %v1783 = vpop.f32.mrf.mxu0
    %v1784 = vadd.f32 %v383, %v1783
    %v1785 = vpop.f32.mrf.mxu0
    %1786 = vdwg.mxu0
    %1787 = vmatpush.bf16.msra.mxu0 %v1219
    %1788 = vmatpush.bf16.msra.mxu0 %v1215
    %1789 = vmatpush.bf16.msra.mxu0 %v1211
    %1790 = vmatpush.bf16.msra.mxu0 %v1207
    %1791 = vmatpush.bf16.msra.mxu0 %v1203
    %1792 = vmatpush.bf16.msra.mxu0 %v1199
    %1793 = vmatpush.bf16.msra.mxu0 %v1195
    %1794 = vmatpush.bf16.msra.mxu0 %v1191
    %1795 = vmatmul.bf16.gmra.mxu0 %v118
    %v1796 = vpop.f32.mrf.mxu0
    %v1797 = vadd.f32 %v1784, %v1796
    %v1798 = vpop.f32.mrf.mxu0
    %1799 = vdwg.mxu0
    %1800 = vmatpush.bf16.msra.mxu0 %v1251
    %1801 = vmatpush.bf16.msra.mxu0 %v1247
    %1802 = vmatpush.bf16.msra.mxu0 %v1243
    %1803 = vmatpush.bf16.msra.mxu0 %v1239
    %1804 = vmatpush.bf16.msra.mxu0 %v1235
    %1805 = vmatpush.bf16.msra.mxu0 %v1231
    %1806 = vmatpush.bf16.msra.mxu0 %v1227
    %1807 = vmatpush.bf16.msra.mxu0 %v1223
    %1808 = vmatmul.bf16.gmra.mxu0 %v119
    %v1809 = vpop.f32.mrf.mxu0
    %v1810 = vadd.f32 %v1797, %v1809
    %v1811 = vpop.f32.mrf.mxu0
    %1812 = vdwg.mxu0
    %1813 = vmatpush.bf16.msra.mxu0 %v1283
    %1814 = vmatpush.bf16.msra.mxu0 %v1279
    %1815 = vmatpush.bf16.msra.mxu0 %v1275
    %1816 = vmatpush.bf16.msra.mxu0 %v1271
    %1817 = vmatpush.bf16.msra.mxu0 %v1267
    %1818 = vmatpush.bf16.msra.mxu0 %v1263
    %1819 = vmatpush.bf16.msra.mxu0 %v1259
    %1820 = vmatpush.bf16.msra.mxu0 %v1255
    %1821 = vmatmul.bf16.gmra.mxu0 %v120
    %v1822 = vpop.f32.mrf.mxu0
    %v1823 = vadd.f32 %v1810, %v1822
    %v1824 = vpop.f32.mrf.mxu0
    %1825 = vdwg.mxu0
    %1826 = vmatpush.bf16.msra.mxu0 %v1315
    %1827 = vmatpush.bf16.msra.mxu0 %v1311
    %1828 = vmatpush.bf16.msra.mxu0 %v1307
    %1829 = vmatpush.bf16.msra.mxu0 %v1303
    %1830 = vmatpush.bf16.msra.mxu0 %v1299
    %1831 = vmatpush.bf16.msra.mxu0 %v1295
    %1832 = vmatpush.bf16.msra.mxu0 %v1291
    %1833 = vmatpush.bf16.msra.mxu0 %v1287
    %1834 = vmatmul.bf16.gmra.mxu0 %v121
    %v1835 = vpop.f32.mrf.mxu0
    %v1836 = vadd.f32 %v1823, %v1835
    %v1837 = vpop.f32.mrf.mxu0
    %1838 = vdwg.mxu0
    %1839 = vmatpush.bf16.msra.mxu0 %v1347
    %1840 = vmatpush.bf16.msra.mxu0 %v1343
    %1841 = vmatpush.bf16.msra.mxu0 %v1339
    %1842 = vmatpush.bf16.msra.mxu0 %v1335
    %1843 = vmatpush.bf16.msra.mxu0 %v1331
    %1844 = vmatpush.bf16.msra.mxu0 %v1327
    %1845 = vmatpush.bf16.msra.mxu0 %v1323
    %1846 = vmatpush.bf16.msra.mxu0 %v1319
    %1847 = vmatmul.bf16.gmra.mxu0 %v122
    %v1848 = vpop.f32.mrf.mxu0
    %v1849 = vadd.f32 %v1836, %v1848
    %v1850 = vpop.f32.mrf.mxu0
    %1851 = vdwg.mxu0
    %1852 = vmatpush.bf16.msra.mxu0 %v1379
    %1853 = vmatpush.bf16.msra.mxu0 %v1375
    %1854 = vmatpush.bf16.msra.mxu0 %v1371
    %1855 = vmatpush.bf16.msra.mxu0 %v1367
    %1856 = vmatpush.bf16.msra.mxu0 %v1363
    %1857 = vmatpush.bf16.msra.mxu0 %v1359
    %1858 = vmatpush.bf16.msra.mxu0 %v1355
    %1859 = vmatpush.bf16.msra.mxu0 %v1351
    %1860 = vmatmul.bf16.gmra.mxu0 %v123
    %v1861 = vpop.f32.mrf.mxu0
    %v1862 = vadd.f32 %v1849, %v1861
    %v1863 = vpop.f32.mrf.mxu0
    %1864 = vdwg.mxu0
    %1865 = vmatpush.bf16.msra.mxu0 %v1411
    %1866 = vmatpush.bf16.msra.mxu0 %v1407
    %1867 = vmatpush.bf16.msra.mxu0 %v1403
    %1868 = vmatpush.bf16.msra.mxu0 %v1399
    %1869 = vmatpush.bf16.msra.mxu0 %v1395
    %1870 = vmatpush.bf16.msra.mxu0 %v1391
    %1871 = vmatpush.bf16.msra.mxu0 %v1387
    %1872 = vmatpush.bf16.msra.mxu0 %v1383
    %1873 = vmatmul.bf16.gmra.mxu0 %v124
    %v1874 = vpop.f32.mrf.mxu0
    %v1875 = vadd.f32 %v1862, %v1874
    %v1876 = vpop.f32.mrf.mxu0
    %1877 = vdwg.mxu0
    %1878 = vmatpush.bf16.msra.mxu0 %v1188
    %1879 = vmatpush.bf16.msra.mxu0 %v1184
    %1880 = vmatpush.bf16.msra.mxu0 %v1180
    %1881 = vmatpush.bf16.msra.mxu0 %v1176
    %1882 = vmatpush.bf16.msra.mxu0 %v1172
    %1883 = vmatpush.bf16.msra.mxu0 %v1168
    %1884 = vmatpush.bf16.msra.mxu0 %v1164
    %1885 = vmatpush.bf16.msra.mxu0 %v1160
    %1886 = vmatmul.bf16.gmra.mxu0 %v117
    %v1887 = vpop.f32.mrf.mxu0
    %v1888 = vadd.f32 %v384, %v1887
    %v1889 = vpop.f32.mrf.mxu0
    %1890 = vdwg.mxu0
    %1891 = vmatpush.bf16.msra.mxu0 %v1220
    %1892 = vmatpush.bf16.msra.mxu0 %v1216
    %1893 = vmatpush.bf16.msra.mxu0 %v1212
    %1894 = vmatpush.bf16.msra.mxu0 %v1208
    %1895 = vmatpush.bf16.msra.mxu0 %v1204
    %1896 = vmatpush.bf16.msra.mxu0 %v1200
    %1897 = vmatpush.bf16.msra.mxu0 %v1196
    %1898 = vmatpush.bf16.msra.mxu0 %v1192
    %1899 = vmatmul.bf16.gmra.mxu0 %v118
    %v1900 = vpop.f32.mrf.mxu0
    %v1901 = vadd.f32 %v1888, %v1900
    %v1902 = vpop.f32.mrf.mxu0
    %1903 = vdwg.mxu0
    %1904 = vmatpush.bf16.msra.mxu0 %v1252
    %1905 = vmatpush.bf16.msra.mxu0 %v1248
    %1906 = vmatpush.bf16.msra.mxu0 %v1244
    %1907 = vmatpush.bf16.msra.mxu0 %v1240
    %1908 = vmatpush.bf16.msra.mxu0 %v1236
    %1909 = vmatpush.bf16.msra.mxu0 %v1232
    %1910 = vmatpush.bf16.msra.mxu0 %v1228
    %1911 = vmatpush.bf16.msra.mxu0 %v1224
    %1912 = vmatmul.bf16.gmra.mxu0 %v119
    %v1913 = vpop.f32.mrf.mxu0
    %v1914 = vadd.f32 %v1901, %v1913
    %v1915 = vpop.f32.mrf.mxu0
    %1916 = vdwg.mxu0
    %1917 = vmatpush.bf16.msra.mxu0 %v1284
    %1918 = vmatpush.bf16.msra.mxu0 %v1280
    %1919 = vmatpush.bf16.msra.mxu0 %v1276
    %1920 = vmatpush.bf16.msra.mxu0 %v1272
    %1921 = vmatpush.bf16.msra.mxu0 %v1268
    %1922 = vmatpush.bf16.msra.mxu0 %v1264
    %1923 = vmatpush.bf16.msra.mxu0 %v1260
    %1924 = vmatpush.bf16.msra.mxu0 %v1256
    %1925 = vmatmul.bf16.gmra.mxu0 %v120
    %v1926 = vpop.f32.mrf.mxu0
    %v1927 = vadd.f32 %v1914, %v1926
    %v1928 = vpop.f32.mrf.mxu0
    %1929 = vdwg.mxu0
    %1930 = vmatpush.bf16.msra.mxu0 %v1316
    %1931 = vmatpush.bf16.msra.mxu0 %v1312
    %1932 = vmatpush.bf16.msra.mxu0 %v1308
    %1933 = vmatpush.bf16.msra.mxu0 %v1304
    %1934 = vmatpush.bf16.msra.mxu0 %v1300
    %1935 = vmatpush.bf16.msra.mxu0 %v1296
    %1936 = vmatpush.bf16.msra.mxu0 %v1292
    %1937 = vmatpush.bf16.msra.mxu0 %v1288
    %1938 = vmatmul.bf16.gmra.mxu0 %v121
    %v1939 = vpop.f32.mrf.mxu0
    %v1940 = vadd.f32 %v1927, %v1939
    %v1941 = vpop.f32.mrf.mxu0
    %1942 = vdwg.mxu0
    %1943 = vmatpush.bf16.msra.mxu0 %v1348
    %1944 = vmatpush.bf16.msra.mxu0 %v1344
    %1945 = vmatpush.bf16.msra.mxu0 %v1340
    %1946 = vmatpush.bf16.msra.mxu0 %v1336
    %1947 = vmatpush.bf16.msra.mxu0 %v1332
    %1948 = vmatpush.bf16.msra.mxu0 %v1328
    %1949 = vmatpush.bf16.msra.mxu0 %v1324
    %1950 = vmatpush.bf16.msra.mxu0 %v1320
    %1951 = vmatmul.bf16.gmra.mxu0 %v122
    %v1952 = vpop.f32.mrf.mxu0
    %v1953 = vadd.f32 %v1940, %v1952
    %v1954 = vpop.f32.mrf.mxu0
    %1955 = vdwg.mxu0
    %1956 = vmatpush.bf16.msra.mxu0 %v1380
    %1957 = vmatpush.bf16.msra.mxu0 %v1376
    %1958 = vmatpush.bf16.msra.mxu0 %v1372
    %1959 = vmatpush.bf16.msra.mxu0 %v1368
    %1960 = vmatpush.bf16.msra.mxu0 %v1364
    %1961 = vmatpush.bf16.msra.mxu0 %v1360
    %1962 = vmatpush.bf16.msra.mxu0 %v1356
    %1963 = vmatpush.bf16.msra.mxu0 %v1352
    %1964 = vmatmul.bf16.gmra.mxu0 %v123
    %v1965 = vpop.f32.mrf.mxu0
    %v1966 = vadd.f32 %v1953, %v1965
    %v1967 = vpop.f32.mrf.mxu0
    %1968 = vdwg.mxu0
    %1969 = vmatpush.bf16.msra.mxu0 %v1412
    %1970 = vmatpush.bf16.msra.mxu0 %v1408
    %1971 = vmatpush.bf16.msra.mxu0 %v1404
    %1972 = vmatpush.bf16.msra.mxu0 %v1400
    %1973 = vmatpush.bf16.msra.mxu0 %v1396
    %1974 = vmatpush.bf16.msra.mxu0 %v1392
    %1975 = vmatpush.bf16.msra.mxu0 %v1388
    %1976 = vmatpush.bf16.msra.mxu0 %v1384
    %1977 = vmatmul.bf16.gmra.mxu0 %v124
    %v1978 = vpop.f32.mrf.mxu0
    %v1979 = vadd.f32 %v1966, %v1978
    %v1980 = vpop.f32.mrf.mxu0
    %1981 = vdwg.mxu0
    %1982 = vmatpush.bf16.msra.mxu0 %v1189
    %1983 = vmatpush.bf16.msra.mxu0 %v1185
    %1984 = vmatpush.bf16.msra.mxu0 %v1181
    %1985 = vmatpush.bf16.msra.mxu0 %v1177
    %1986 = vmatpush.bf16.msra.mxu0 %v1173
    %1987 = vmatpush.bf16.msra.mxu0 %v1169
    %1988 = vmatpush.bf16.msra.mxu0 %v1165
    %1989 = vmatpush.bf16.msra.mxu0 %v1161
    %1990 = vmatmul.bf16.gmra.mxu0 %v117
    %v1991 = vpop.f32.mrf.mxu0
    %v1992 = vadd.f32 %v385, %v1991
    %v1993 = vpop.f32.mrf.mxu0
    %1994 = vdwg.mxu0
    %1995 = vmatpush.bf16.msra.mxu0 %v1221
    %1996 = vmatpush.bf16.msra.mxu0 %v1217
    %1997 = vmatpush.bf16.msra.mxu0 %v1213
    %1998 = vmatpush.bf16.msra.mxu0 %v1209
    %1999 = vmatpush.bf16.msra.mxu0 %v1205
    %2000 = vmatpush.bf16.msra.mxu0 %v1201
    %2001 = vmatpush.bf16.msra.mxu0 %v1197
    %2002 = vmatpush.bf16.msra.mxu0 %v1193
    %2003 = vmatmul.bf16.gmra.mxu0 %v118
    %v2004 = vpop.f32.mrf.mxu0
    %v2005 = vadd.f32 %v1992, %v2004
    %v2006 = vpop.f32.mrf.mxu0
    %2007 = vdwg.mxu0
    %2008 = vmatpush.bf16.msra.mxu0 %v1253
    %2009 = vmatpush.bf16.msra.mxu0 %v1249
    %2010 = vmatpush.bf16.msra.mxu0 %v1245
    %2011 = vmatpush.bf16.msra.mxu0 %v1241
    %2012 = vmatpush.bf16.msra.mxu0 %v1237
    %2013 = vmatpush.bf16.msra.mxu0 %v1233
    %2014 = vmatpush.bf16.msra.mxu0 %v1229
    %2015 = vmatpush.bf16.msra.mxu0 %v1225
    %2016 = vmatmul.bf16.gmra.mxu0 %v119
    %v2017 = vpop.f32.mrf.mxu0
    %v2018 = vadd.f32 %v2005, %v2017
    %v2019 = vpop.f32.mrf.mxu0
    %2020 = vdwg.mxu0
    %2021 = vmatpush.bf16.msra.mxu0 %v1285
    %2022 = vmatpush.bf16.msra.mxu0 %v1281
    %2023 = vmatpush.bf16.msra.mxu0 %v1277
    %2024 = vmatpush.bf16.msra.mxu0 %v1273
    %2025 = vmatpush.bf16.msra.mxu0 %v1269
    %2026 = vmatpush.bf16.msra.mxu0 %v1265
    %2027 = vmatpush.bf16.msra.mxu0 %v1261
    %2028 = vmatpush.bf16.msra.mxu0 %v1257
    %2029 = vmatmul.bf16.gmra.mxu0 %v120
    %v2030 = vpop.f32.mrf.mxu0
    %v2031 = vadd.f32 %v2018, %v2030
    %v2032 = vpop.f32.mrf.mxu0
    %2033 = vdwg.mxu0
    %2034 = vmatpush.bf16.msra.mxu0 %v1317
    %2035 = vmatpush.bf16.msra.mxu0 %v1313
    %2036 = vmatpush.bf16.msra.mxu0 %v1309
    %2037 = vmatpush.bf16.msra.mxu0 %v1305
    %2038 = vmatpush.bf16.msra.mxu0 %v1301
    %2039 = vmatpush.bf16.msra.mxu0 %v1297
    %2040 = vmatpush.bf16.msra.mxu0 %v1293
    %2041 = vmatpush.bf16.msra.mxu0 %v1289
    %2042 = vmatmul.bf16.gmra.mxu0 %v121
    %v2043 = vpop.f32.mrf.mxu0
    %v2044 = vadd.f32 %v2031, %v2043
    %v2045 = vpop.f32.mrf.mxu0
    %2046 = vdwg.mxu0
    %2047 = vmatpush.bf16.msra.mxu0 %v1349
    %2048 = vmatpush.bf16.msra.mxu0 %v1345
    %2049 = vmatpush.bf16.msra.mxu0 %v1341
    %2050 = vmatpush.bf16.msra.mxu0 %v1337
    %2051 = vmatpush.bf16.msra.mxu0 %v1333
    %2052 = vmatpush.bf16.msra.mxu0 %v1329
    %2053 = vmatpush.bf16.msra.mxu0 %v1325
    %2054 = vmatpush.bf16.msra.mxu0 %v1321
    %2055 = vmatmul.bf16.gmra.mxu0 %v122
    %v2056 = vpop.f32.mrf.mxu0
    %v2057 = vadd.f32 %v2044, %v2056
    %v2058 = vpop.f32.mrf.mxu0
    %2059 = vdwg.mxu0
    %2060 = vmatpush.bf16.msra.mxu0 %v1381
    %2061 = vmatpush.bf16.msra.mxu0 %v1377
    %2062 = vmatpush.bf16.msra.mxu0 %v1373
    %2063 = vmatpush.bf16.msra.mxu0 %v1369
    %2064 = vmatpush.bf16.msra.mxu0 %v1365
    %2065 = vmatpush.bf16.msra.mxu0 %v1361
    %2066 = vmatpush.bf16.msra.mxu0 %v1357
    %2067 = vmatpush.bf16.msra.mxu0 %v1353
    %2068 = vmatmul.bf16.gmra.mxu0 %v123
    %v2069 = vpop.f32.mrf.mxu0
    %v2070 = vadd.f32 %v2057, %v2069
    %v2071 = vpop.f32.mrf.mxu0
    %2072 = vdwg.mxu0
    %2073 = vmatpush.bf16.msra.mxu0 %v1413
    %2074 = vmatpush.bf16.msra.mxu0 %v1409
    %2075 = vmatpush.bf16.msra.mxu0 %v1405
    %2076 = vmatpush.bf16.msra.mxu0 %v1401
    %2077 = vmatpush.bf16.msra.mxu0 %v1397
    %2078 = vmatpush.bf16.msra.mxu0 %v1393
    %2079 = vmatpush.bf16.msra.mxu0 %v1389
    %2080 = vmatpush.bf16.msra.mxu0 %v1385
    %2081 = vmatmul.bf16.gmra.mxu0 %v124
    %v2082 = vpop.f32.mrf.mxu0
    %v2083 = vadd.f32 %v2070, %v2082
    %v2084 = vpop.f32.mrf.mxu0
    %2085 = vdwg.mxu0
    %v2086 = vmax.f32 %v1771, 0.0
    %v2087 = vmax.f32 %v1875, 0.0
    %v2088 = vmax.f32 %v1979, 0.0
    %v2089 = vmax.f32 %v2083, 0.0
    %v2090 = vpack.c.bf16 %v2086, %v2086
    %v2091 = vpack.c.bf16 %v2087, %v2087
    %v2092 = vpack.c.bf16 %v2088, %v2088
    %v2093 = vpack.c.bf16 %v2089, %v2089
    %v2094 = vld [vmem:[#allocation5] sm:$0xff]
    %v2095 = vld [vmem:[#allocation5 + $0x8] sm:$0xff]
    %v2096 = vld [vmem:[#allocation5 + $0x10] sm:$0xff]
    %v2097 = vld [vmem:[#allocation5 + $0x18] sm:$0xff]
    %v2098 = vld [vmem:[#allocation5 + $0x20] sm:$0xff]
    %v2099 = vld [vmem:[#allocation5 + $0x28] sm:$0xff]
    %v2100 = vld [vmem:[#allocation5 + $0x30] sm:$0xff]
    %v2101 = vld [vmem:[#allocation5 + $0x38] sm:$0xff]
    %v2102 = vld [vmem:[#allocation5 + $0x40] sm:$0xff]
    %v2103 = vld [vmem:[#allocation5 + $0x48] sm:$0xff]
    %v2104 = vld [vmem:[#allocation5 + $0x50] sm:$0xff]
    %v2105 = vld [vmem:[#allocation5 + $0x58] sm:$0xff]
    %v2106 = vld [vmem:[#allocation5 + $0x60] sm:$0xff]
    %v2107 = vld [vmem:[#allocation5 + $0x68] sm:$0xff]
    %v2108 = vld [vmem:[#allocation5 + $0x70] sm:$0xff]
    %v2109 = vld [vmem:[#allocation5 + $0x78] sm:$0xff]
    %v2110 = vld [vmem:[#allocation5 + $0x80] sm:$0xff]
    %v2111 = vld [vmem:[#allocation5 + $0x88] sm:$0xff]
    %v2112 = vld [vmem:[#allocation5 + $0x90] sm:$0xff]
    %v2113 = vld [vmem:[#allocation5 + $0x98] sm:$0xff]
    %v2114 = vld [vmem:[#allocation5 + $0xa0] sm:$0xff]
    %v2115 = vld [vmem:[#allocation5 + $0xa8] sm:$0xff]
    %v2116 = vld [vmem:[#allocation5 + $0xb0] sm:$0xff]
    %v2117 = vld [vmem:[#allocation5 + $0xb8] sm:$0xff]
    %v2118 = vld [vmem:[#allocation5 + $0xc0] sm:$0xff]
    %v2119 = vld [vmem:[#allocation5 + $0xc8] sm:$0xff]
    %v2120 = vld [vmem:[#allocation5 + $0xd0] sm:$0xff]
    %v2121 = vld [vmem:[#allocation5 + $0xd8] sm:$0xff]
    %v2122 = vld [vmem:[#allocation5 + $0xe0] sm:$0xff]
    %v2123 = vld [vmem:[#allocation5 + $0xe8] sm:$0xff]
    %v2124 = vld [vmem:[#allocation5 + $0xf0] sm:$0xff]
    %v2125 = vld [vmem:[#allocation5 + $0xf8] sm:$0xff]
    %v2126 = vld [vmem:[#allocation5 + $0x100] sm:$0xff]
    %v2127 = vld [vmem:[#allocation5 + $0x108] sm:$0xff]
    %v2128 = vld [vmem:[#allocation5 + $0x110] sm:$0xff]
    %v2129 = vld [vmem:[#allocation5 + $0x118] sm:$0xff]
    %v2130 = vld [vmem:[#allocation5 + $0x120] sm:$0xff]
    %v2131 = vld [vmem:[#allocation5 + $0x128] sm:$0xff]
    %v2132 = vld [vmem:[#allocation5 + $0x130] sm:$0xff]
    %v2133 = vld [vmem:[#allocation5 + $0x138] sm:$0xff]
    %v2134 = vld [vmem:[#allocation5 + $0x140] sm:$0xff]
    %v2135 = vld [vmem:[#allocation5 + $0x148] sm:$0xff]
    %v2136 = vld [vmem:[#allocation5 + $0x150] sm:$0xff]
    %v2137 = vld [vmem:[#allocation5 + $0x158] sm:$0xff]
    %v2138 = vld [vmem:[#allocation5 + $0x160] sm:$0xff]
    %v2139 = vld [vmem:[#allocation5 + $0x168] sm:$0xff]
    %v2140 = vld [vmem:[#allocation5 + $0x170] sm:$0xff]
    %v2141 = vld [vmem:[#allocation5 + $0x178] sm:$0xff]
    %v2142 = vld [vmem:[#allocation5 + $0x180] sm:$0xff]
    %v2143 = vld [vmem:[#allocation5 + $0x188] sm:$0xff]
    %v2144 = vld [vmem:[#allocation5 + $0x190] sm:$0xff]
    %v2145 = vld [vmem:[#allocation5 + $0x198] sm:$0xff]
    %v2146 = vld [vmem:[#allocation5 + $0x1a0] sm:$0xff]
    %v2147 = vld [vmem:[#allocation5 + $0x1a8] sm:$0xff]
    %v2148 = vld [vmem:[#allocation5 + $0x1b0] sm:$0xff]
    %v2149 = vld [vmem:[#allocation5 + $0x1b8] sm:$0xff]
    %v2150 = vld [vmem:[#allocation5 + $0x1c0] sm:$0xff]
    %v2151 = vld [vmem:[#allocation5 + $0x1c8] sm:$0xff]
    %v2152 = vld [vmem:[#allocation5 + $0x1d0] sm:$0xff]
    %v2153 = vld [vmem:[#allocation5 + $0x1d8] sm:$0xff]
    %v2154 = vld [vmem:[#allocation5 + $0x1e0] sm:$0xff]
    %v2155 = vld [vmem:[#allocation5 + $0x1e8] sm:$0xff]
    %v2156 = vld [vmem:[#allocation5 + $0x1f0] sm:$0xff]
    %v2157 = vld [vmem:[#allocation5 + $0x1f8] sm:$0xff]
    %v2159 = vperm.slane %v88, 0
    %v2160 = vperm.slane %v88, 1
    %v2227 = vunpack.c.l.b16 %v2094
    %v2228 = vunpack.c.h.b16 %v2094
    %v2229 = vunpack.c.l.b16 %v2095
    %v2230 = vunpack.c.h.b16 %v2095
    %v2231 = vunpack.c.l.b16 %v2096
    %v2232 = vunpack.c.h.b16 %v2096
    %v2233 = vunpack.c.l.b16 %v2097
    %v2234 = vunpack.c.h.b16 %v2097
    %v2235 = vunpack.c.l.b16 %v2098
    %v2236 = vunpack.c.h.b16 %v2098
    %v2237 = vunpack.c.l.b16 %v2099
    %v2238 = vunpack.c.h.b16 %v2099
    %v2239 = vunpack.c.l.b16 %v2100
    %v2240 = vunpack.c.h.b16 %v2100
    %v2241 = vunpack.c.l.b16 %v2101
    %v2242 = vunpack.c.h.b16 %v2101
    %v2243 = vunpack.c.l.b16 %v2102
    %v2244 = vunpack.c.h.b16 %v2102
    %v2245 = vunpack.c.l.b16 %v2103
    %v2246 = vunpack.c.h.b16 %v2103
    %v2247 = vunpack.c.l.b16 %v2104
    %v2248 = vunpack.c.h.b16 %v2104
    %v2249 = vunpack.c.l.b16 %v2105
    %v2250 = vunpack.c.h.b16 %v2105
    %v2251 = vunpack.c.l.b16 %v2106
    %v2252 = vunpack.c.h.b16 %v2106
    %v2253 = vunpack.c.l.b16 %v2107
    %v2254 = vunpack.c.h.b16 %v2107
    %v2255 = vunpack.c.l.b16 %v2108
    %v2256 = vunpack.c.h.b16 %v2108
    %v2257 = vunpack.c.l.b16 %v2109
    %v2258 = vunpack.c.h.b16 %v2109
    %v2259 = vunpack.c.l.b16 %v2110
    %v2260 = vunpack.c.h.b16 %v2110
    %v2261 = vunpack.c.l.b16 %v2111
    %v2262 = vunpack.c.h.b16 %v2111
    %v2263 = vunpack.c.l.b16 %v2112
    %v2264 = vunpack.c.h.b16 %v2112
    %v2265 = vunpack.c.l.b16 %v2113
    %v2266 = vunpack.c.h.b16 %v2113
    %v2267 = vunpack.c.l.b16 %v2114
    %v2268 = vunpack.c.h.b16 %v2114
    %v2269 = vunpack.c.l.b16 %v2115
    %v2270 = vunpack.c.h.b16 %v2115
    %v2271 = vunpack.c.l.b16 %v2116
    %v2272 = vunpack.c.h.b16 %v2116
    %v2273 = vunpack.c.l.b16 %v2117
    %v2274 = vunpack.c.h.b16 %v2117
    %v2275 = vunpack.c.l.b16 %v2118
    %v2276 = vunpack.c.h.b16 %v2118
    %v2277 = vunpack.c.l.b16 %v2119
    %v2278 = vunpack.c.h.b16 %v2119
    %v2279 = vunpack.c.l.b16 %v2120
    %v2280 = vunpack.c.h.b16 %v2120
    %v2281 = vunpack.c.l.b16 %v2121
    %v2282 = vunpack.c.h.b16 %v2121
    %v2283 = vunpack.c.l.b16 %v2122
    %v2284 = vunpack.c.h.b16 %v2122
    %v2285 = vunpack.c.l.b16 %v2123
    %v2286 = vunpack.c.h.b16 %v2123
    %v2287 = vunpack.c.l.b16 %v2124
    %v2288 = vunpack.c.h.b16 %v2124
    %v2289 = vunpack.c.l.b16 %v2125
    %v2290 = vunpack.c.h.b16 %v2125
    %v2291 = vunpack.c.l.b16 %v2126
    %v2292 = vunpack.c.h.b16 %v2126
    %v2293 = vunpack.c.l.b16 %v2127
    %v2294 = vunpack.c.h.b16 %v2127
    %v2295 = vunpack.c.l.b16 %v2128
    %v2296 = vunpack.c.h.b16 %v2128
    %v2297 = vunpack.c.l.b16 %v2129
    %v2298 = vunpack.c.h.b16 %v2129
    %v2299 = vunpack.c.l.b16 %v2130
    %v2300 = vunpack.c.h.b16 %v2130
    %v2301 = vunpack.c.l.b16 %v2131
    %v2302 = vunpack.c.h.b16 %v2131
    %v2303 = vunpack.c.l.b16 %v2132
    %v2304 = vunpack.c.h.b16 %v2132
    %v2305 = vunpack.c.l.b16 %v2133
    %v2306 = vunpack.c.h.b16 %v2133
    %v2307 = vunpack.c.l.b16 %v2134
    %v2308 = vunpack.c.h.b16 %v2134
    %v2309 = vunpack.c.l.b16 %v2135
    %v2310 = vunpack.c.h.b16 %v2135
    %v2311 = vunpack.c.l.b16 %v2136
    %v2312 = vunpack.c.h.b16 %v2136
    %v2313 = vunpack.c.l.b16 %v2137
    %v2314 = vunpack.c.h.b16 %v2137
    %v2315 = vunpack.c.l.b16 %v2138
    %v2316 = vunpack.c.h.b16 %v2138
    %v2317 = vunpack.c.l.b16 %v2139
    %v2318 = vunpack.c.h.b16 %v2139
    %v2319 = vunpack.c.l.b16 %v2140
    %v2320 = vunpack.c.h.b16 %v2140
    %v2321 = vunpack.c.l.b16 %v2141
    %v2322 = vunpack.c.h.b16 %v2141
    %v2323 = vunpack.c.l.b16 %v2142
    %v2324 = vunpack.c.h.b16 %v2142
    %v2325 = vunpack.c.l.b16 %v2143
    %v2326 = vunpack.c.h.b16 %v2143
    %v2327 = vunpack.c.l.b16 %v2144
    %v2328 = vunpack.c.h.b16 %v2144
    %v2329 = vunpack.c.l.b16 %v2145
    %v2330 = vunpack.c.h.b16 %v2145
    %v2331 = vunpack.c.l.b16 %v2146
    %v2332 = vunpack.c.h.b16 %v2146
    %v2333 = vunpack.c.l.b16 %v2147
    %v2334 = vunpack.c.h.b16 %v2147
    %v2335 = vunpack.c.l.b16 %v2148
    %v2336 = vunpack.c.h.b16 %v2148
    %v2337 = vunpack.c.l.b16 %v2149
    %v2338 = vunpack.c.h.b16 %v2149
    %v2339 = vunpack.c.l.b16 %v2150
    %v2340 = vunpack.c.h.b16 %v2150
    %v2341 = vunpack.c.l.b16 %v2151
    %v2342 = vunpack.c.h.b16 %v2151
    %v2343 = vunpack.c.l.b16 %v2152
    %v2344 = vunpack.c.h.b16 %v2152
    %v2345 = vunpack.c.l.b16 %v2153
    %v2346 = vunpack.c.h.b16 %v2153
    %v2347 = vunpack.c.l.b16 %v2154
    %v2348 = vunpack.c.h.b16 %v2154
    %v2349 = vunpack.c.l.b16 %v2155
    %v2350 = vunpack.c.h.b16 %v2155
    %v2351 = vunpack.c.l.b16 %v2156
    %v2352 = vunpack.c.h.b16 %v2156
    %v2353 = vunpack.c.l.b16 %v2157
    %v2354 = vunpack.c.h.b16 %v2157
    %v2355 = vpack.c.b16 %v2229, %v2227
    %v2356 = vpack.c.b16 %v2230, %v2228
    %v2357 = vpack.c.b16 %v2233, %v2231
    %v2358 = vpack.c.b16 %v2234, %v2232
    %v2359 = vpack.c.b16 %v2237, %v2235
    %v2360 = vpack.c.b16 %v2238, %v2236
    %v2361 = vpack.c.b16 %v2241, %v2239
    %v2362 = vpack.c.b16 %v2242, %v2240
    %v2363 = vpack.c.b16 %v2245, %v2243
    %v2364 = vpack.c.b16 %v2246, %v2244
    %v2365 = vpack.c.b16 %v2249, %v2247
    %v2366 = vpack.c.b16 %v2250, %v2248
    %v2367 = vpack.c.b16 %v2253, %v2251
    %v2368 = vpack.c.b16 %v2254, %v2252
    %v2369 = vpack.c.b16 %v2257, %v2255
    %v2370 = vpack.c.b16 %v2258, %v2256
    %v2371 = vpack.c.b16 %v2261, %v2259
    %v2372 = vpack.c.b16 %v2262, %v2260
    %v2373 = vpack.c.b16 %v2265, %v2263
    %v2374 = vpack.c.b16 %v2266, %v2264
    %v2375 = vpack.c.b16 %v2269, %v2267
    %v2376 = vpack.c.b16 %v2270, %v2268
    %v2377 = vpack.c.b16 %v2273, %v2271
    %v2378 = vpack.c.b16 %v2274, %v2272
    %v2379 = vpack.c.b16 %v2277, %v2275
    %v2380 = vpack.c.b16 %v2278, %v2276
    %v2381 = vpack.c.b16 %v2281, %v2279
    %v2382 = vpack.c.b16 %v2282, %v2280
    %v2383 = vpack.c.b16 %v2285, %v2283
    %v2384 = vpack.c.b16 %v2286, %v2284
    %v2385 = vpack.c.b16 %v2289, %v2287
    %v2386 = vpack.c.b16 %v2290, %v2288
    %v2387 = vpack.c.b16 %v2293, %v2291
    %v2388 = vpack.c.b16 %v2294, %v2292
    %v2389 = vpack.c.b16 %v2297, %v2295
    %v2390 = vpack.c.b16 %v2298, %v2296
    %v2391 = vpack.c.b16 %v2301, %v2299
    %v2392 = vpack.c.b16 %v2302, %v2300
    %v2393 = vpack.c.b16 %v2305, %v2303
    %v2394 = vpack.c.b16 %v2306, %v2304
    %v2395 = vpack.c.b16 %v2309, %v2307
    %v2396 = vpack.c.b16 %v2310, %v2308
    %v2397 = vpack.c.b16 %v2313, %v2311
    %v2398 = vpack.c.b16 %v2314, %v2312
    %v2399 = vpack.c.b16 %v2317, %v2315
    %v2400 = vpack.c.b16 %v2318, %v2316
    %v2401 = vpack.c.b16 %v2321, %v2319
    %v2402 = vpack.c.b16 %v2322, %v2320
    %v2403 = vpack.c.b16 %v2325, %v2323
    %v2404 = vpack.c.b16 %v2326, %v2324
    %v2405 = vpack.c.b16 %v2329, %v2327
    %v2406 = vpack.c.b16 %v2330, %v2328
    %v2407 = vpack.c.b16 %v2333, %v2331
    %v2408 = vpack.c.b16 %v2334, %v2332
    %v2409 = vpack.c.b16 %v2337, %v2335
    %v2410 = vpack.c.b16 %v2338, %v2336
    %v2411 = vpack.c.b16 %v2341, %v2339
    %v2412 = vpack.c.b16 %v2342, %v2340
    %v2413 = vpack.c.b16 %v2345, %v2343
    %v2414 = vpack.c.b16 %v2346, %v2344
    %v2415 = vpack.c.b16 %v2349, %v2347
    %v2416 = vpack.c.b16 %v2350, %v2348
    %v2417 = vpack.c.b16 %v2353, %v2351
    %v2418 = vpack.c.b16 %v2354, %v2352
    %2483 = vmatpush.bf16.msra.mxu0 %v2369
    %2484 = vmatpush.bf16.msra.mxu0 %v2367
    %2485 = vmatpush.bf16.msra.mxu0 %v2365
    %2486 = vmatpush.bf16.msra.mxu0 %v2363
    %2487 = vmatpush.bf16.msra.mxu0 %v2361
    %2488 = vmatpush.bf16.msra.mxu0 %v2359
    %2489 = vmatpush.bf16.msra.mxu0 %v2357
    %2490 = vmatpush.bf16.msra.mxu0 %v2355
    %2491 = vmatmul.bf16.gmra.mxu0 %v2090
    %v2492 = vpop.f32.mrf.mxu0
    %v2493 = vadd.f32 %v2159, %v2492
    %v2494 = vpop.f32.mrf.mxu0
    %2495 = vdwg.mxu0
    %2496 = vmatpush.bf16.msra.mxu0 %v2385
    %2497 = vmatpush.bf16.msra.mxu0 %v2383
    %2498 = vmatpush.bf16.msra.mxu0 %v2381
    %2499 = vmatpush.bf16.msra.mxu0 %v2379
    %2500 = vmatpush.bf16.msra.mxu0 %v2377
    %2501 = vmatpush.bf16.msra.mxu0 %v2375
    %2502 = vmatpush.bf16.msra.mxu0 %v2373
    %2503 = vmatpush.bf16.msra.mxu0 %v2371
    %2504 = vmatmul.bf16.gmra.mxu0 %v2091
    %v2505 = vpop.f32.mrf.mxu0
    %v2506 = vadd.f32 %v2493, %v2505
    %v2507 = vpop.f32.mrf.mxu0
    %2508 = vdwg.mxu0
    %2509 = vmatpush.bf16.msra.mxu0 %v2401
    %2510 = vmatpush.bf16.msra.mxu0 %v2399
    %2511 = vmatpush.bf16.msra.mxu0 %v2397
    %2512 = vmatpush.bf16.msra.mxu0 %v2395
    %2513 = vmatpush.bf16.msra.mxu0 %v2393
    %2514 = vmatpush.bf16.msra.mxu0 %v2391
    %2515 = vmatpush.bf16.msra.mxu0 %v2389
    %2516 = vmatpush.bf16.msra.mxu0 %v2387
    %2517 = vmatmul.bf16.gmra.mxu0 %v2092
    %v2518 = vpop.f32.mrf.mxu0
    %v2519 = vadd.f32 %v2506, %v2518
    %v2520 = vpop.f32.mrf.mxu0
    %2521 = vdwg.mxu0
    %2522 = vmatpush.bf16.msra.mxu0 %v2417
    %2523 = vmatpush.bf16.msra.mxu0 %v2415
    %2524 = vmatpush.bf16.msra.mxu0 %v2413
    %2525 = vmatpush.bf16.msra.mxu0 %v2411
    %2526 = vmatpush.bf16.msra.mxu0 %v2409
    %2527 = vmatpush.bf16.msra.mxu0 %v2407
    %2528 = vmatpush.bf16.msra.mxu0 %v2405
    %2529 = vmatpush.bf16.msra.mxu0 %v2403
    %2530 = vmatmul.bf16.gmra.mxu0 %v2093
    %v2531 = vpop.f32.mrf.mxu0
    %v2532 = vadd.f32 %v2519, %v2531
    %v2533 = vpop.f32.mrf.mxu0
    %2534 = vdwg.mxu0
    %2535 = vmatpush.bf16.msra.mxu0 %v2370
    %2536 = vmatpush.bf16.msra.mxu0 %v2368
    %2537 = vmatpush.bf16.msra.mxu0 %v2366
    %2538 = vmatpush.bf16.msra.mxu0 %v2364
    %2539 = vmatpush.bf16.msra.mxu0 %v2362
    %2540 = vmatpush.bf16.msra.mxu0 %v2360
    %2541 = vmatpush.bf16.msra.mxu0 %v2358
    %2542 = vmatpush.bf16.msra.mxu0 %v2356
    %2543 = vmatmul.bf16.gmra.mxu0 %v2090
    %v2544 = vpop.f32.mrf.mxu0
    %v2545 = vadd.f32 %v2160, %v2544
    %v2546 = vpop.f32.mrf.mxu0
    %2547 = vdwg.mxu0
    %2548 = vmatpush.bf16.msra.mxu0 %v2386
    %2549 = vmatpush.bf16.msra.mxu0 %v2384
    %2550 = vmatpush.bf16.msra.mxu0 %v2382
    %2551 = vmatpush.bf16.msra.mxu0 %v2380
    %2552 = vmatpush.bf16.msra.mxu0 %v2378
    %2553 = vmatpush.bf16.msra.mxu0 %v2376
    %2554 = vmatpush.bf16.msra.mxu0 %v2374
    %2555 = vmatpush.bf16.msra.mxu0 %v2372
    %2556 = vmatmul.bf16.gmra.mxu0 %v2091
    %v2557 = vpop.f32.mrf.mxu0
    %v2558 = vadd.f32 %v2545, %v2557
    %v2559 = vpop.f32.mrf.mxu0
    %2560 = vdwg.mxu0
    %2561 = vmatpush.bf16.msra.mxu0 %v2402
    %2562 = vmatpush.bf16.msra.mxu0 %v2400
    %2563 = vmatpush.bf16.msra.mxu0 %v2398
    %2564 = vmatpush.bf16.msra.mxu0 %v2396
    %2565 = vmatpush.bf16.msra.mxu0 %v2394
    %2566 = vmatpush.bf16.msra.mxu0 %v2392
    %2567 = vmatpush.bf16.msra.mxu0 %v2390
    %2568 = vmatpush.bf16.msra.mxu0 %v2388
    %2569 = vmatmul.bf16.gmra.mxu0 %v2092
    %v2570 = vpop.f32.mrf.mxu0
    %v2571 = vadd.f32 %v2558, %v2570
    %v2572 = vpop.f32.mrf.mxu0
    %2573 = vdwg.mxu0
    %2574 = vmatpush.bf16.msra.mxu0 %v2418
    %2575 = vmatpush.bf16.msra.mxu0 %v2416
    %2576 = vmatpush.bf16.msra.mxu0 %v2414
    %2577 = vmatpush.bf16.msra.mxu0 %v2412
    %2578 = vmatpush.bf16.msra.mxu0 %v2410
    %2579 = vmatpush.bf16.msra.mxu0 %v2408
    %2580 = vmatpush.bf16.msra.mxu0 %v2406
    %2581 = vmatpush.bf16.msra.mxu0 %v2404
    %2582 = vmatmul.bf16.gmra.mxu0 %v2093
    %v2583 = vpop.f32.mrf.mxu0
    %v2584 = vadd.f32 %v2571, %v2583
    %v2585 = vpop.f32.mrf.mxu0
    %2586 = vdwg.mxu0
    %v2587 = vmax.f32 %v2532, 0.0
    %v2588 = vmax.f32 %v2584, 0.0
    %v2589 = vpack.c.bf16 %v2587, %v2587
    %v2590 = vpack.c.bf16 %v2588, %v2588
    %v2591 = vld [vmem:[#allocation7] sm:$0xf]
    %v2592 = vld [vmem:[#allocation7 + $0x4] sm:$0xf]
    %v2593 = vld [vmem:[#allocation7 + $0x8] sm:$0xf]
    %v2594 = vld [vmem:[#allocation7 + $0xc] sm:$0xf]
    %v2595 = vld [vmem:[#allocation7 + $0x10] sm:$0xf]
    %v2596 = vld [vmem:[#allocation7 + $0x14] sm:$0xf]
    %v2597 = vld [vmem:[#allocation7 + $0x18] sm:$0xf]
    %v2598 = vld [vmem:[#allocation7 + $0x1c] sm:$0xf]
    %v2599 = vld [vmem:[#allocation7 + $0x20] sm:$0xf]
    %v2600 = vld [vmem:[#allocation7 + $0x24] sm:$0xf]
    %v2601 = vld [vmem:[#allocation7 + $0x28] sm:$0xf]
    %v2602 = vld [vmem:[#allocation7 + $0x2c] sm:$0xf]
    %v2603 = vld [vmem:[#allocation7 + $0x30] sm:$0xf]
    %v2604 = vld [vmem:[#allocation7 + $0x34] sm:$0xf]
    %v2605 = vld [vmem:[#allocation7 + $0x38] sm:$0xf]
    %v2606 = vld [vmem:[#allocation7 + $0x3c] sm:$0xf]
    %v2607 = vld [vmem:[#allocation7 + $0x40] sm:$0xf]
    %v2608 = vld [vmem:[#allocation7 + $0x44] sm:$0xf]
    %v2609 = vld [vmem:[#allocation7 + $0x48] sm:$0xf]
    %v2610 = vld [vmem:[#allocation7 + $0x4c] sm:$0xf]
    %v2611 = vld [vmem:[#allocation7 + $0x50] sm:$0xf]
    %v2612 = vld [vmem:[#allocation7 + $0x54] sm:$0xf]
    %v2613 = vld [vmem:[#allocation7 + $0x58] sm:$0xf]
    %v2614 = vld [vmem:[#allocation7 + $0x5c] sm:$0xf]
    %v2615 = vld [vmem:[#allocation7 + $0x60] sm:$0xf]
    %v2616 = vld [vmem:[#allocation7 + $0x64] sm:$0xf]
    %v2617 = vld [vmem:[#allocation7 + $0x68] sm:$0xf]
    %v2618 = vld [vmem:[#allocation7 + $0x6c] sm:$0xf]
    %v2619 = vld [vmem:[#allocation7 + $0x70] sm:$0xf]
    %v2620 = vld [vmem:[#allocation7 + $0x74] sm:$0xf]
    %v2621 = vld [vmem:[#allocation7 + $0x78] sm:$0xf]
    %v2622 = vld [vmem:[#allocation7 + $0x7c] sm:$0xf]
    %v2624 = vperm.slane %v89, 0
    %v2658 = vunpack.c.l.b16 %v2591
    %v2659 = vunpack.c.l.b16 %v2592
    %v2660 = vunpack.c.l.b16 %v2593
    %v2661 = vunpack.c.l.b16 %v2594
    %v2662 = vunpack.c.l.b16 %v2595
    %v2663 = vunpack.c.l.b16 %v2596
    %v2664 = vunpack.c.l.b16 %v2597
    %v2665 = vunpack.c.l.b16 %v2598
    %v2666 = vunpack.c.l.b16 %v2599
    %v2667 = vunpack.c.l.b16 %v2600
    %v2668 = vunpack.c.l.b16 %v2601
    %v2669 = vunpack.c.l.b16 %v2602
    %v2670 = vunpack.c.l.b16 %v2603
    %v2671 = vunpack.c.l.b16 %v2604
    %v2672 = vunpack.c.l.b16 %v2605
    %v2673 = vunpack.c.l.b16 %v2606
    %v2674 = vunpack.c.l.b16 %v2607
    %v2675 = vunpack.c.l.b16 %v2608
    %v2676 = vunpack.c.l.b16 %v2609
    %v2677 = vunpack.c.l.b16 %v2610
    %v2678 = vunpack.c.l.b16 %v2611
    %v2679 = vunpack.c.l.b16 %v2612
    %v2680 = vunpack.c.l.b16 %v2613
    %v2681 = vunpack.c.l.b16 %v2614
    %v2682 = vunpack.c.l.b16 %v2615
    %v2683 = vunpack.c.l.b16 %v2616
    %v2684 = vunpack.c.l.b16 %v2617
    %v2685 = vunpack.c.l.b16 %v2618
    %v2686 = vunpack.c.l.b16 %v2619
    %v2687 = vunpack.c.l.b16 %v2620
    %v2688 = vunpack.c.l.b16 %v2621
    %v2689 = vunpack.c.l.b16 %v2622
    %v2690 = vpack.c.b16 %v2659, %v2658
    %v2691 = vpack.c.b16 %v2661, %v2660
    %v2692 = vpack.c.b16 %v2663, %v2662
    %v2693 = vpack.c.b16 %v2665, %v2664
    %v2694 = vpack.c.b16 %v2667, %v2666
    %v2695 = vpack.c.b16 %v2669, %v2668
    %v2696 = vpack.c.b16 %v2671, %v2670
    %v2697 = vpack.c.b16 %v2673, %v2672
    %v2698 = vpack.c.b16 %v2675, %v2674
    %v2699 = vpack.c.b16 %v2677, %v2676
    %v2700 = vpack.c.b16 %v2679, %v2678
    %v2701 = vpack.c.b16 %v2681, %v2680
    %v2702 = vpack.c.b16 %v2683, %v2682
    %v2703 = vpack.c.b16 %v2685, %v2684
    %v2704 = vpack.c.b16 %v2687, %v2686
    %v2705 = vpack.c.b16 %v2689, %v2688
    %2722 = vmatpush.bf16.msra.mxu0 %v2697
    %2723 = vmatpush.bf16.msra.mxu0 %v2696
    %2724 = vmatpush.bf16.msra.mxu0 %v2695
    %2725 = vmatpush.bf16.msra.mxu0 %v2694
    %2726 = vmatpush.bf16.msra.mxu0 %v2693
    %2727 = vmatpush.bf16.msra.mxu0 %v2692
    %2728 = vmatpush.bf16.msra.mxu0 %v2691
    %2729 = vmatpush.bf16.msra.mxu0 %v2690
    %2730 = vmatmul.bf16.gmra.mxu0 %v2589
    %v2731 = vpop.f32.mrf.mxu0
    %v2732 = vadd.f32 %v2624, %v2731
    %v2733 = vpop.f32.mrf.mxu0
    %2734 = vdwg.mxu0
    %2735 = vmatpush.bf16.msra.mxu0 %v2705
    %2736 = vmatpush.bf16.msra.mxu0 %v2704
    %2737 = vmatpush.bf16.msra.mxu0 %v2703
    %2738 = vmatpush.bf16.msra.mxu0 %v2702
    %2739 = vmatpush.bf16.msra.mxu0 %v2701
    %2740 = vmatpush.bf16.msra.mxu0 %v2700
    %2741 = vmatpush.bf16.msra.mxu0 %v2699
    %2742 = vmatpush.bf16.msra.mxu0 %v2698
    %2743 = vmatmul.bf16.gmra.mxu0 %v2590
    %v2744 = vpop.f32.mrf.mxu0
    %v2745 = vadd.f32 %v2732, %v2744
    %v2746 = vpop.f32.mrf.mxu0
    %2747 = vdwg.mxu0
    %v2748 = vmax.f32 %v2745, 0.0
    %v2749 = vpack.c.bf16 %v2748, %v2748
    %v2750 = vld [vmem:[#allocation8] sm:$0xf]
    %v2751 = vld [vmem:[#allocation8 + $0x4] sm:$0xf]
    %v2752 = vld [vmem:[#allocation8 + $0x8] sm:$0xf]
    %v2753 = vld [vmem:[#allocation8 + $0xc] sm:$0xf]
    %v2754 = vld [vmem:[#allocation8 + $0x10] sm:$0xf]
    %v2755 = vld [vmem:[#allocation8 + $0x14] sm:$0xf]
    %v2756 = vld [vmem:[#allocation8 + $0x18] sm:$0xf]
    %v2757 = vld [vmem:[#allocation8 + $0x1c] sm:$0xf]
    %v2758 = vld [vmem:[#allocation8 + $0x20] sm:$0xf]
    %v2759 = vld [vmem:[#allocation8 + $0x24] sm:$0xf]
    %v2760 = vld [vmem:[#allocation8 + $0x28] sm:$0xf]
    %v2761 = vld [vmem:[#allocation8 + $0x2c] sm:$0xf]
    %v2762 = vld [vmem:[#allocation8 + $0x30] sm:$0xf]
    %v2763 = vld [vmem:[#allocation8 + $0x34] sm:$0xf]
    %v2764 = vld [vmem:[#allocation8 + $0x38] sm:$0xf]
    %v2765 = vld [vmem:[#allocation8 + $0x3c] sm:$0xf]
    %v2767 = vperm.slane %v90, 0
    %v2785 = vunpack.c.l.b16 %v2750
    %v2786 = vunpack.c.l.b16 %v2751
    %v2787 = vunpack.c.l.b16 %v2752
    %v2788 = vunpack.c.l.b16 %v2753
    %v2789 = vunpack.c.l.b16 %v2754
    %v2790 = vunpack.c.l.b16 %v2755
    %v2791 = vunpack.c.l.b16 %v2756
    %v2792 = vunpack.c.l.b16 %v2757
    %v2793 = vunpack.c.l.b16 %v2758
    %v2794 = vunpack.c.l.b16 %v2759
    %v2795 = vunpack.c.l.b16 %v2760
    %v2796 = vunpack.c.l.b16 %v2761
    %v2797 = vunpack.c.l.b16 %v2762
    %v2798 = vunpack.c.l.b16 %v2763
    %v2799 = vunpack.c.l.b16 %v2764
    %v2800 = vunpack.c.l.b16 %v2765
    %v2801 = vpack.c.b16 %v2786, %v2785
    %v2802 = vpack.c.b16 %v2788, %v2787
    %v2803 = vpack.c.b16 %v2790, %v2789
    %v2804 = vpack.c.b16 %v2792, %v2791
    %v2805 = vpack.c.b16 %v2794, %v2793
    %v2806 = vpack.c.b16 %v2796, %v2795
    %v2807 = vpack.c.b16 %v2798, %v2797
    %v2808 = vpack.c.b16 %v2800, %v2799
    %2817 = vmatpush.bf16.msra.mxu0 %v2808
    %2818 = vmatpush.bf16.msra.mxu0 %v2807
    %2819 = vmatpush.bf16.msra.mxu0 %v2806
    %2820 = vmatpush.bf16.msra.mxu0 %v2805
    %2821 = vmatpush.bf16.msra.mxu0 %v2804
    %2822 = vmatpush.bf16.msra.mxu0 %v2803
    %2823 = vmatpush.bf16.msra.mxu0 %v2802
    %2824 = vmatpush.bf16.msra.mxu0 %v2801
    %2825 = vmatmul.bf16.gmra.mxu0 %v2749
    %v2826 = vpop.f32.mrf.mxu0
    %v2827 = vadd.f32 %v2767, %v2826
    %v2828 = vpop.f32.mrf.mxu0
    %2829 = vdwg.mxu0
    %v2830 = vxor.u32 %v2827, 2147483648
    %v2831 = vmul.f32 %v2830, 1.442695
    %v2832 = vpow.pop %v2831
    %v2833 = vadd.f32 %v2832, 1.0
    %v2834 = vrcp.pop %v2833
    %v2835 = vmul.f32 %v2833, %v2834
    %v2836 = vsub.f32 1.0, %v2835
    %v2837 = vmul.f32 %v2834, %v2836
    %v2838 = vadd.f32 %v2834, %v2837
    %vm2839 = vweird.f32 %v2833
    %vm2840 = vweird.f32 %v2834
    %vm2841 = vmor %vm2839, %vm2840
    %v2842 = vsel %vm2841, %v2834, %v2838
    %v2843 = vand.u32 2147483647, %v2833
    %vm2844 = vcmp.eq.f32.partialorder %v2843, 8.507059e+37
    %v2845 = vand.u32 %v2833, 2147483648
    %v2846 = vor.u32 1.1754944e-38, %v2845
    %v2847 = vsel %vm2844, %v2846, %v2842
    %v2848 = vmul.f32 1.0, %v2847
    %2849 = vst [vmem:[#allocation10] sm:$0x3] %v2848
    // Predicated region
    $region42: #{actor_forward.1} parent=1 // pred_check
      _
    $region43: #{actor_forward.1} parent=1 // pred_check_branch
      %2851 = sbr.rel (0) target = $region45
    $region44: #{actor_forward.1} parent=1 // pred_region
      %2853 = vsyncadd [#allocation4], 0
      %s2855 = sshll.u32 [#allocation10], 4
      %s2856 = int_to_ptr.vmem [resolvable:$true] %s2855
      %s2857 = sshll.u32 %s6, 4
      %s2858 = int_to_ptr.hbm [resolvable:$true] %s2857
      %2860 = dma.vmem_to_hbm [thread:$0]  %s2856, 32, %s2858, [#allocation4]
    $region45: #{actor_forward.1} parent=1 // pred_fallthru
      _
    // Predicated region
    $region46: #{actor_forward.1} parent=1 // pred_check
      _
    $region47: #{actor_forward.1} parent=1 // pred_check_branch
      %2862 = sbr.rel (0) target = $region49
    $region48: #{actor_forward.1} parent=1 // pred_region
      %2864 = dma.done [#allocation4], 32
    $region49: #{actor_forward.1} parent=1 // pred_fallthru
      _
    %2865 = vsyncpa [#allocation3], 1
    %2866 = vsyncpa [#allocation6], 1
    %2867 = vsyncpa [#allocation9], 1
    %2868 = vsyncpa [#allocation4], 1

</llo_original>
